<compile_context>
chip_gen: v7x
topology: tpu7x:2x2x1
jax: 0.10.0
libtpu: 0.0.40
codegen_flags: <defaults>
</compile_context>

<pallas_src>
import jax
import jax.numpy as jnp
from jax.experimental import pallas as pl
from jax.experimental.pallas import tpu as pltpu

K = 3                     # conv kernel size of the synthetic backbone
PAD = 1
FEATURE_DIM = 32
N_CLASSES = 10
OUT_LANES = 128           # lane-dense merged output: [features | logits | zero padding]


def _round_up(n, m):
    return (n + m - 1) // m * m


def _mixmatch_kernel(x_ref, t_ref, bconv_ref, head_ref, bhead_ref, out_ref):
    # x_ref:     (TB, H+2, (W+2)*C)  bf16   padded activations for TB images
    # t_ref:     (K, (W+2)*C, W*F)   bf16   row-Toeplitz conv weights
    # bconv_ref: (1, W*F)            f32    conv bias tiled over w
    # head_ref:  (W*F, OUT_LANES)    f32    [GAP/HW | GAP/HW @ Wcls | 0]
    # bhead_ref: (1, OUT_LANES)      f32    [0      | b_cls        | 0]
    # out_ref:   (TB, OUT_LANES)     f32
    tb, hp, wpc = x_ref.shape
    kh, _, wf = t_ref.shape
    h = hp - (kh - 1)

    # Load once; do all slicing/reshaping on an f32 value (vanilla (8,128) layouts),
    # cast each window back to bf16 only for the MXU.
    x = x_ref[...].astype(jnp.float32)                               # (TB, H+2, WPC)

    acc = jnp.zeros((tb * h, wf), jnp.float32)
    for dh in range(kh):                                             # static unroll
        win = x[:, dh:dh + h, :].reshape(tb * h, wpc)                # (TB*H, WPC) f32
        acc = acc + jnp.dot(win.astype(jnp.bfloat16), t_ref[dh],
                            preferred_element_type=jnp.float32)      # (TB*H, W*F) f32

    act = jnp.maximum(acc + bconv_ref[...], 0.0)                     # bias + ReLU (f32)
    hsum = jnp.sum(act.reshape(tb, h, wf), axis=1)                   # sum over h -> (TB, W*F)

    # One combined matmul: features (GAP) and logits (GAP @ Wcls + b_cls), lane-dense.
    out = jnp.dot(hsum, head_ref[...],
                  preferred_element_type=jnp.float32) + bhead_ref[...]
    out_ref[...] = out                                               # single unmasked store


def _build_row_toeplitz(w_conv, w_out, w_pad):
    # w_conv: (F, C, K, K) PyTorch conv weight -> (K, (W+2)*C, W*F) row-Toeplitz slabs
    # T[dh, (w+dw)*C + c, w*F + f] = w_conv[f, c, dh, dw]
    f, c, kh, kw = w_conv.shape
    wk = jnp.transpose(w_conv, (2, 3, 1, 0))                         # (kh, kw, C, F)
    eye_w = jnp.eye(w_out, dtype=w_conv.dtype)
    slabs = []
    for dh in range(kh):
        t = jnp.zeros((w_pad * c, w_out * f), w_conv.dtype)
        for dw in range(kw):
            band = jnp.kron(eye_w, wk[dh, dw])                       # (W*C, W*F) block-diag
            t = t + jnp.pad(band, ((dw * c, (w_pad - w_out) * c - dw * c), (0, 0)))
        slabs.append(t)
    return jnp.stack(slabs, axis=0)


def init_params(key, c_in):
    k1, k2, k3, k4 = jax.random.split(key, 4)
    return {
        # PyTorch layouts: conv (F, C_in, kH, kW), Linear (n_classes, F)
        "w_conv": jax.random.normal(k1, (FEATURE_DIM, c_in, K, K), jnp.float32) * 0.1,
        "b_conv": jax.random.normal(k2, (FEATURE_DIM,), jnp.float32) * 0.1,
        "w_cls": jax.random.normal(k3, (N_CLASSES, FEATURE_DIM), jnp.float32) * 0.1,
        "b_cls": jax.random.normal(k4, (N_CLASSES,), jnp.float32) * 0.1,
    }


def mixmatch_forward(x_nchw, params, tb=64):
    b, c, h, w = x_nchw.shape
    hp, wp = h + 2 * PAD, w + 2 * PAD
    wpc = wp * c
    wf = w * FEATURE_DIM

    # Batch tile: multiple of 8 (sublane-aligned output block), padded batch divisible by it.
    tb = min(_round_up(tb, 8), _round_up(b, 8))
    bp = _round_up(b, tb)

    # ---- activation prep: NCHW -> padded NHWC slab, W and C merged (no im2col in HBM) ----
    x_nhwc = jnp.transpose(x_nchw, (0, 2, 3, 1)).astype(jnp.float32)
    x_pad = jnp.pad(x_nhwc, ((0, bp - b), (PAD, PAD), (PAD, PAD), (0, 0)))
    x_slab = x_pad.reshape(bp, hp, wpc).astype(jnp.bfloat16)         # (Bp, H+2, (W+2)*C)

    # ---- weight prep (tiny, resident) ----
    toeplitz = _build_row_toeplitz(params["w_conv"], w, wp).astype(jnp.bfloat16)
    bconv_tiled = jnp.tile(params["b_conv"], w).reshape(1, wf).astype(jnp.float32)

    gap = jnp.tile(jnp.eye(FEATURE_DIM, dtype=jnp.float32), (w, 1)) / (h * w)  # (W*F, F)
    wcls = params["w_cls"].T.astype(jnp.float32)                               # (F, NC)
    head = jnp.zeros((wf, OUT_LANES), jnp.float32)
    head = head.at[:, :FEATURE_DIM].set(gap)
    head = head.at[:, FEATURE_DIM:FEATURE_DIM + N_CLASSES].set(gap @ wcls)
    bhead = jnp.zeros((1, OUT_LANES), jnp.float32)
    bhead = bhead.at[0, FEATURE_DIM:FEATURE_DIM + N_CLASSES].set(params["b_cls"])

    grid = (bp // tb,)
    out = pl.pallas_call(
        _mixmatch_kernel,
        out_shape=jax.ShapeDtypeStruct((bp, OUT_LANES), jnp.float32),
        grid_spec=pltpu.PrefetchScalarGridSpec(
            num_scalar_prefetch=0,
            grid=grid,
            in_specs=[
                pl.BlockSpec((tb, hp, wpc), lambda i: (i, 0, 0)),        # streamed acts
                pl.BlockSpec((K, wpc, wf), lambda i: (0, 0, 0)),         # conv weights
                pl.BlockSpec((1, wf), lambda i: (0, 0)),                 # conv bias
                pl.BlockSpec((wf, OUT_LANES), lambda i: (0, 0)),         # fused GAP+classifier
                pl.BlockSpec((1, OUT_LANES), lambda i: (0, 0)),          # classifier bias
            ],
            out_specs=pl.BlockSpec((tb, OUT_LANES), lambda i: (i, 0)),
        ),
        compiler_params=pltpu.CompilerParams(
            dimension_semantics=("parallel",),           # shards batch tiles across TCs (v7x)
            vmem_limit_bytes=32 * 1024 * 1024,           # tb=64 uses ~10 MiB; safe on v7x 64 MiB
        ),
    )(x_slab, toeplitz, bconv_tiled, head, bhead)

    return {
        "feature_map": out[:b, :FEATURE_DIM],
        "logits": out[:b, FEATURE_DIM:FEATURE_DIM + N_CLASSES],
    }


def _reference(x_nchw, params):
    # Pure-JAX f32 reference (im2col conv + bias + ReLU + GAP + Linear).
    b, c, h, w = x_nchw.shape
    x_nhwc = jnp.transpose(x_nchw, (0, 2, 3, 1)).astype(jnp.float32)
    xp = jnp.pad(x_nhwc, ((0, 0), (PAD, PAD), (PAD, PAD), (0, 0)))
    cols = []
    for dh in range(K):
        for dw in range(K):
            cols.append(xp[:, dh:dh + h, dw:dw + w, :])
    patches = jnp.stack(cols, axis=3).reshape(b, h * w, K * K * c)
    wmat = jnp.transpose(params["w_conv"], (2, 3, 1, 0)).reshape(K * K * c, FEATURE_DIM)
    conv = jnp.einsum("bpk,kf->bpf", patches, wmat) + params["b_conv"]
    act = jnp.maximum(conv, 0.0)
    feat = jnp.mean(act, axis=1)                                     # (B, F)
    logits = feat @ params["w_cls"].T + params["b_cls"]              # (B, NC)
    return feat, logits


if __name__ == "__main__":
    key = jax.random.PRNGKey(0)
    kx, kp = jax.random.split(key)
    x = jax.random.normal(kx, (2, 4, 16, 16), jnp.float32)           # NCHW like PyTorch
    params = init_params(kp, c_in=4)

    fwd = jax.jit(mixmatch_forward)
    out = fwd(x, params)
    jax.block_until_ready(out["logits"])

    feat_ref, logits_ref = _reference(x, params)
    assert out["feature_map"].shape == (2, FEATURE_DIM)
    assert out["logits"].shape == (2, N_CLASSES)
    # bf16-streamed activations/weights with f32 accumulation -> compare at ~1e-2.
    assert jnp.allclose(out["feature_map"], feat_ref, atol=1e-2, rtol=1e-2)
    assert jnp.allclose(out["logits"], logits_ref, atol=1e-2, rtol=1e-2)

    print("KERNEL_OK")
</pallas_src>

<mosaic_0001>
module attributes {stable_mosaic.version = 11 : i64} {
  func.func @_mixmatch_kernel(%arg0: i32, %arg1: memref<8x18x72xbf16, #tpu.memory_space<vmem>>, %arg2: memref<3x72x512xbf16, #tpu.memory_space<vmem>>, %arg3: memref<1x512xf32, #tpu.memory_space<vmem>>, %arg4: memref<512x128xf32, #tpu.memory_space<vmem>>, %arg5: memref<1x128xf32, #tpu.memory_space<vmem>>, %arg6: memref<8x128xf32, #tpu.memory_space<vmem>>) attributes {dimension_semantics = [#tpu.dimension_semantics<parallel>], iteration_bounds = array<i64: 1>, scalar_prefetch = 0 : i64, scratch_operands = 0 : i64, tpu.core_type = #tpu.core_type<tc>, window_params = [{transform_indices = @transform_0, window_bounds = array<i64: 8, 18, 72>}, {pipeline_mode = #tpu.pipeline_mode<synchronous>, transform_indices = @transform_1, window_bounds = array<i64: 3, 72, 512>}, {pipeline_mode = #tpu.pipeline_mode<synchronous>, transform_indices = @transform_2, window_bounds = array<i64: 1, 512>}, {pipeline_mode = #tpu.pipeline_mode<synchronous>, transform_indices = @transform_3, window_bounds = array<i64: 512, 128>}, {pipeline_mode = #tpu.pipeline_mode<synchronous>, transform_indices = @transform_4, window_bounds = array<i64: 1, 128>}, {transform_indices = @transform_5, window_bounds = array<i64: 8, 128>}]} {
    %c0 = arith.constant 0 : index
    %c0_0 = arith.constant 0 : index
    %c0_1 = arith.constant 0 : index
    %0 = vector.load %arg1[%c0, %c0_0, %c0_1] : memref<8x18x72xbf16, #tpu.memory_space<vmem>>, vector<8x18x72xbf16>
    %1 = arith.extf %0 : vector<8x18x72xbf16> to vector<8x18x72xf32>
    %cst = arith.constant 0.000000e+00 : f32
    %2 = vector.broadcast %cst : f32 to vector<128x512xf32>
    %3 = vector.extract_strided_slice %1 {offsets = [0, 0, 0], sizes = [8, 16, 72], strides = [1, 1, 1]} : vector<8x18x72xf32> to vector<8x16x72xf32>
    %4 = vector.shape_cast %3 : vector<8x16x72xf32> to vector<128x72xf32>
    %5 = arith.truncf %4 : vector<128x72xf32> to vector<128x72xbf16>
    %c0_2 = arith.constant 0 : index
    %c0_3 = arith.constant 0 : index
    %c0_4 = arith.constant 0 : index
    %6 = vector.load %arg2[%c0_2, %c0_3, %c0_4] : memref<3x72x512xbf16, #tpu.memory_space<vmem>>, vector<1x72x512xbf16>
    %7 = vector.shape_cast %6 : vector<1x72x512xbf16> to vector<72x512xbf16>
    %cst_5 = arith.constant dense<0.000000e+00> : vector<128x512xf32>
    %8 = tpu.matmul %5, %7, %cst_5 {dimension_numbers = #tpu.dot_dimension_numbers<[1], [0], [0], [1], [0, 0, 1, 1], [], []>} : vector<128x72xbf16>, vector<72x512xbf16>, vector<128x512xf32> -> vector<128x512xf32>
    %9 = arith.addf %2, %8 : vector<128x512xf32>
    %10 = vector.extract_strided_slice %1 {offsets = [0, 1, 0], sizes = [8, 16, 72], strides = [1, 1, 1]} : vector<8x18x72xf32> to vector<8x16x72xf32>
    %11 = vector.shape_cast %10 : vector<8x16x72xf32> to vector<128x72xf32>
    %12 = arith.truncf %11 : vector<128x72xf32> to vector<128x72xbf16>
    %c1 = arith.constant 1 : index
    %c0_6 = arith.constant 0 : index
    %c0_7 = arith.constant 0 : index
    %13 = vector.load %arg2[%c1, %c0_6, %c0_7] : memref<3x72x512xbf16, #tpu.memory_space<vmem>>, vector<1x72x512xbf16>
    %14 = vector.shape_cast %13 : vector<1x72x512xbf16> to vector<72x512xbf16>
    %cst_8 = arith.constant dense<0.000000e+00> : vector<128x512xf32>
    %15 = tpu.matmul %12, %14, %cst_8 {dimension_numbers = #tpu.dot_dimension_numbers<[1], [0], [0], [1], [0, 0, 1, 1], [], []>} : vector<128x72xbf16>, vector<72x512xbf16>, vector<128x512xf32> -> vector<128x512xf32>
    %16 = arith.addf %9, %15 : vector<128x512xf32>
    %17 = vector.extract_strided_slice %1 {offsets = [0, 2, 0], sizes = [8, 16, 72], strides = [1, 1, 1]} : vector<8x18x72xf32> to vector<8x16x72xf32>
    %18 = vector.shape_cast %17 : vector<8x16x72xf32> to vector<128x72xf32>
    %19 = arith.truncf %18 : vector<128x72xf32> to vector<128x72xbf16>
    %c2 = arith.constant 2 : index
    %c0_9 = arith.constant 0 : index
    %c0_10 = arith.constant 0 : index
    %20 = vector.load %arg2[%c2, %c0_9, %c0_10] : memref<3x72x512xbf16, #tpu.memory_space<vmem>>, vector<1x72x512xbf16>
    %21 = vector.shape_cast %20 : vector<1x72x512xbf16> to vector<72x512xbf16>
    %cst_11 = arith.constant dense<0.000000e+00> : vector<128x512xf32>
    %22 = tpu.matmul %19, %21, %cst_11 {dimension_numbers = #tpu.dot_dimension_numbers<[1], [0], [0], [1], [0, 0, 1, 1], [], []>} : vector<128x72xbf16>, vector<72x512xbf16>, vector<128x512xf32> -> vector<128x512xf32>
    %23 = arith.addf %16, %22 : vector<128x512xf32>
    %c0_12 = arith.constant 0 : index
    %c0_13 = arith.constant 0 : index
    %24 = vector.load %arg3[%c0_12, %c0_13] : memref<1x512xf32, #tpu.memory_space<vmem>>, vector<1x512xf32>
    %25 = vector.broadcast %24 : vector<1x512xf32> to vector<128x512xf32>
    %26 = arith.addf %23, %25 : vector<128x512xf32>
    %cst_14 = arith.constant 0.000000e+00 : f32
    %27 = vector.broadcast %cst_14 : f32 to vector<128x512xf32>
    %28 = arith.maximumf %26, %27 : vector<128x512xf32>
    %29 = vector.shape_cast %28 : vector<128x512xf32> to vector<8x16x512xf32>
    %cst_15 = arith.constant dense<0.000000e+00> : vector<8x512xf32>
    %30 = vector.multi_reduction <add>, %29, %cst_15 [1] : vector<8x16x512xf32> to vector<8x512xf32>
    %c0_16 = arith.constant 0 : index
    %c0_17 = arith.constant 0 : index
    %31 = vector.load %arg4[%c0_16, %c0_17] : memref<512x128xf32, #tpu.memory_space<vmem>>, vector<512x128xf32>
    %cst_18 = arith.constant dense<0.000000e+00> : vector<8x128xf32>
    %32 = tpu.matmul %30, %31, %cst_18 {dimension_numbers = #tpu.dot_dimension_numbers<[1], [0], [0], [1], [0, 0, 1, 1], [], []>} : vector<8x512xf32>, vector<512x128xf32>, vector<8x128xf32> -> vector<8x128xf32>
    %c0_19 = arith.constant 0 : index
    %c0_20 = arith.constant 0 : index
    %33 = vector.load %arg5[%c0_19, %c0_20] : memref<1x128xf32, #tpu.memory_space<vmem>>, vector<1x128xf32>
    %34 = vector.broadcast %33 : vector<1x128xf32> to vector<8x128xf32>
    %35 = arith.addf %32, %34 : vector<8x128xf32>
    %c0_21 = arith.constant 0 : index
    %c0_22 = arith.constant 0 : index
    %36 = vector.load %arg6[%c0_21, %c0_22] : memref<8x128xf32, #tpu.memory_space<vmem>>, vector<8x128xf32>
    tpu.vector_store %arg6[%c0_21, %c0_22], %35 {strides = array<i32>} : memref<8x128xf32, #tpu.memory_space<vmem>>, vector<8x128xf32>,
    return
  }
  func.func @transform_0(%arg0: i32) -> (i32, i32, i32) {
    %c0_i32 = arith.constant 0 : i32
    %c0_i32_0 = arith.constant 0 : i32
    %c0_i32_1 = arith.constant 0 : i32
    return %arg0, %c0_i32, %c0_i32_0 : i32, i32, i32
  }
  func.func @transform_1(%arg0: i32) -> (i32, i32, i32) {
    %c0_i32 = arith.constant 0 : i32
    %c0_i32_0 = arith.constant 0 : i32
    %c0_i32_1 = arith.constant 0 : i32
    %c0_i32_2 = arith.constant 0 : i32
    return %c0_i32, %c0_i32_0, %c0_i32_1 : i32, i32, i32
  }
  func.func @transform_2(%arg0: i32) -> (i32, i32) {
    %c0_i32 = arith.constant 0 : i32
    %c0_i32_0 = arith.constant 0 : i32
    %c0_i32_1 = arith.constant 0 : i32
    return %c0_i32, %c0_i32_0 : i32, i32
  }
  func.func @transform_3(%arg0: i32) -> (i32, i32) {
    %c0_i32 = arith.constant 0 : i32
    %c0_i32_0 = arith.constant 0 : i32
    %c0_i32_1 = arith.constant 0 : i32
    return %c0_i32, %c0_i32_0 : i32, i32
  }
  func.func @transform_4(%arg0: i32) -> (i32, i32) {
    %c0_i32 = arith.constant 0 : i32
    %c0_i32_0 = arith.constant 0 : i32
    %c0_i32_1 = arith.constant 0 : i32
    return %c0_i32, %c0_i32_0 : i32, i32
  }
  func.func @transform_5(%arg0: i32) -> (i32, i32) {
    %c0_i32 = arith.constant 0 : i32
    %c0_i32_0 = arith.constant 0 : i32
    return %arg0, %c0_i32 : i32, i32
  }
}

</mosaic_0001>

<llo_original>
// kernel: tile.13
$region0: #{tile.13}
  #allocation0 [shape = 's32[1]{0}', space=sflag, size = 0x4, scoped, tag = 'scoped memory for tile.13']
  %s0 = inlined_call_operand.vmem [shape: f32[32], index: 0, kind: input, shape index: {}]
  %s1 = inlined_call_operand.vmem [shape: f32[16,32], index: 1, kind: output, shape index: {}]
  // Predicated region
  $region2: #{tile.13} parent=0 // pred_check
    _
  $region3: #{tile.13} parent=0 // pred_check_branch
    %3 = sbr.rel (0) target = $region5
  $region4: #{tile.13} parent=0 // pred_region
    _
  $region5: #{tile.13} parent=0 // pred_fallthru
    _
  %v4 = vld [vmem:[%s0] ss:$0 sm:$0xff]
  %5 = vst [vmem:[%s1] sm:$0xff] %v4
  %s6 = scalar_lea.vmem %s1, 8
  %7 = vst [vmem:[%s6] sm:$0xff] %v4

// kernel: tile.14
$region0: #{tile.14}
  %s0 = inlined_call_operand.vmem [shape: f32[16,32], index: 0, kind: input, shape index: {}]
  %s1 = inlined_call_operand.vmem [shape: f32[1,512], index: 1, kind: output, shape index: {}]
  $region1: #{tile.14} parent=0
    #allocation0 [shape = 'u8[16384]{0}', space=vmem, size = 0x4000, scoped, tag = 'scoped mem for output reshape']
    %v2 = vld [vmem:[%s0] ss:$4 sm:$0xf]
    %vm3 = vcmask 261120
    %4 = vst.msk [vmem:[#allocation0] ss:$8 sm:$0xf] %vm3, %v2
    %s5 = scalar_lea.vmem %s0, 3
    %v6 = vld [vmem:[%s5] ss:$4 sm:$0xf]
    %7 = vrot.lane.b32.xlu0 %v6, 96
    %v8 = vpop.permute.xlu0 %7
    %vm9 = vcmask 1048320
    %10 = vst.msk [vmem:[#allocation0] ss:$8 sm:$0xf] %vm9, %v8
    %s11 = scalar_lea.vmem %s0, 2
    %v12 = vld [vmem:[%s11] ss:$4 sm:$0xf]
    %13 = vrot.lane.b32.xlu0 %v12, 64
    %v14 = vpop.permute.xlu0 %13
    %vm15 = vcmask 785920
    %16 = vst.msk [vmem:[#allocation0] ss:$8 sm:$0xf] %vm15, %v14
    %s17 = scalar_lea.vmem %s0, 1
    %v18 = vld [vmem:[%s17] ss:$4 sm:$0xf]
    %19 = vrot.lane.b32.xlu0 %v18, 32
    %v20 = vpop.permute.xlu0 %19
    %vm21 = vcmask 523520
    %22 = vst.msk [vmem:[#allocation0] ss:$8 sm:$0xf] %vm21, %v20
    %s24 = sshllo.u32 0, 1
    %v26 = vld [vmem:[#allocation0] sm:%s24]
    %s27 = sshllo.u32 0, 1
    %28 = vst [vmem:[%s1] sm:%s27] %v26
    %s29 = scalar_lea.vmem [#allocation0], 8
    %v30 = vld [vmem:[%s29] sm:%s24]
    %s31 = sshllo.u32 0, 1
    %s32 = scalar_lea.vmem %s1, 1
    %33 = vst [vmem:[%s32] sm:%s31] %v30
    %s34 = scalar_lea.vmem [#allocation0], 16
    %v35 = vld [vmem:[%s34] sm:%s24]
    %s36 = sshllo.u32 0, 1
    %s37 = smul.addr 1, 2
    %s38 = scalar_lea.vmem %s1, %s37
    %39 = vst [vmem:[%s38] sm:%s36] %v35
    %s40 = scalar_lea.vmem [#allocation0], 24
    %v41 = vld [vmem:[%s40] sm:%s24]
    %s42 = sshllo.u32 0, 1
    %s43 = smul.addr 1, 3
    %s44 = scalar_lea.vmem %s1, %s43
    %45 = vst [vmem:[%s44] sm:%s42] %v41

// kernel: mixmatch_forward.1
$region0: #{mixmatch_forward.1}
  #allocation0 [shape = 'u32[]', space=smem, size = 0x4, offset = 0x4, fixed_abs, tag = 'smem constant byte address 0x4 - core index']
  #allocation1 [shape = 'u32[144,128]{1,0:T(1,128)}', space=vmem, size = 0x12000, scoped, tag = 'internal scratch']
  %s0 = inlined_call_operand.vmem [shape: bf16[8,18,72], index: 0, kind: input, shape index: {}]
  %s1 = inlined_call_operand.vmem [shape: bf16[3,72,512], index: 1, kind: input, shape index: {}]
  %s2 = inlined_call_operand.vmem [shape: f32[1,512], index: 2, kind: input, shape index: {}]
  %s3 = inlined_call_operand.vmem [shape: f32[512,128], index: 3, kind: input, shape index: {}]
  %s4 = inlined_call_operand.vmem [shape: f32[1,128], index: 4, kind: input, shape index: {}]
  %s5 = inlined_call_operand.vmem [shape: f32[8,128], index: 5, kind: output, shape index: {}]
  %s6 = sld [smem:[#allocation0]]
  $region30: #{mixmatch_forward.1} parent=0
    _
  %s8 = ssub.s32 1, %s6
  %s9 = scalar_select 0, %s8, %s6
  // Predicated region
  $region2: #{mixmatch_forward.1} parent=0 // pred_check
    _
  $region3: #{mixmatch_forward.1} parent=0 // pred_check_branch
    %11 = sbr.rel (0) target = $region5
  $region4: #{mixmatch_forward.1} parent=0 // pred_region
    _
  $region5: #{mixmatch_forward.1} parent=0 // pred_fallthru
    _
  // Predicated region
  $region6: #{mixmatch_forward.1} parent=0 // pred_check
    _
  $region7: #{mixmatch_forward.1} parent=0 // pred_check_branch
    %13 = sbr.rel (0) target = $region9
  $region8: #{mixmatch_forward.1} parent=0 // pred_region
    _
  $region9: #{mixmatch_forward.1} parent=0 // pred_fallthru
    _
  // Predicated region
  $region10: #{mixmatch_forward.1} parent=0 // pred_check
    _
  $region11: #{mixmatch_forward.1} parent=0 // pred_check_branch
    %15 = sbr.rel (0) target = $region13
  $region12: #{mixmatch_forward.1} parent=0 // pred_region
    _
  $region13: #{mixmatch_forward.1} parent=0 // pred_fallthru
    _
  // Predicated region
  $region14: #{mixmatch_forward.1} parent=0 // pred_check
    _
  $region15: #{mixmatch_forward.1} parent=0 // pred_check_branch
    %17 = sbr.rel (0) target = $region17
  $region16: #{mixmatch_forward.1} parent=0 // pred_region
    _
  $region17: #{mixmatch_forward.1} parent=0 // pred_fallthru
    _
  // Predicated region
  $region18: #{mixmatch_forward.1} parent=0 // pred_check
    _
  $region19: #{mixmatch_forward.1} parent=0 // pred_check_branch
    %19 = sbr.rel (0) target = $region21
  $region20: #{mixmatch_forward.1} parent=0 // pred_region
    _
  $region21: #{mixmatch_forward.1} parent=0 // pred_fallthru
    _
  %v21 = vld [vmem:[%s0] sm:$0xf]
  %v22 = vld [vmem:[%s0 + $0x4] sm:$0xf]
  %v23 = vld [vmem:[%s0 + $0x8] sm:$0x1]
  %v24 = vld [vmem:[%s0 + $0xc] sm:$0xf]
  %v25 = vld [vmem:[%s0 + $0x10] sm:$0xf]
  %v26 = vld [vmem:[%s0 + $0x14] sm:$0x1]
  %v27 = vld [vmem:[%s0 + $0x18] sm:$0xf]
  %v28 = vld [vmem:[%s0 + $0x1c] sm:$0xf]
  %v29 = vld [vmem:[%s0 + $0x20] sm:$0x1]
  %v30 = vld [vmem:[%s0 + $0x24] sm:$0xf]
  %v31 = vld [vmem:[%s0 + $0x28] sm:$0xf]
  %v32 = vld [vmem:[%s0 + $0x2c] sm:$0x1]
  %v33 = vld [vmem:[%s0 + $0x30] sm:$0xf]
  %v34 = vld [vmem:[%s0 + $0x34] sm:$0xf]
  %v35 = vld [vmem:[%s0 + $0x38] sm:$0x1]
  %v36 = vld [vmem:[%s0 + $0x3c] sm:$0xf]
  %v37 = vld [vmem:[%s0 + $0x40] sm:$0xf]
  %v38 = vld [vmem:[%s0 + $0x44] sm:$0x1]
  %v39 = vld [vmem:[%s0 + $0x48] sm:$0xf]
  %v40 = vld [vmem:[%s0 + $0x4c] sm:$0xf]
  %v41 = vld [vmem:[%s0 + $0x50] sm:$0x1]
  %v42 = vld [vmem:[%s0 + $0x54] sm:$0xf]
  %v43 = vld [vmem:[%s0 + $0x58] sm:$0xf]
  %v44 = vld [vmem:[%s0 + $0x5c] sm:$0x1]
  %v45 = vunpack.c.l.bf16 %v21
  %v46 = vunpack.c.l.bf16 %v22
  %v47 = vunpack.c.l.bf16 %v23
  %v48 = vunpack.c.l.bf16 %v24
  %v49 = vunpack.c.l.bf16 %v25
  %v50 = vunpack.c.l.bf16 %v26
  %v51 = vunpack.c.l.bf16 %v27
  %v52 = vunpack.c.l.bf16 %v28
  %v53 = vunpack.c.l.bf16 %v29
  %v54 = vunpack.c.l.bf16 %v30
  %v55 = vunpack.c.l.bf16 %v31
  %v56 = vunpack.c.l.bf16 %v32
  %v57 = vunpack.c.l.bf16 %v33
  %v58 = vunpack.c.l.bf16 %v34
  %v59 = vunpack.c.l.bf16 %v35
  %v60 = vunpack.c.l.bf16 %v36
  %v61 = vunpack.c.l.bf16 %v37
  %v62 = vunpack.c.l.bf16 %v38
  %v63 = vunpack.c.l.bf16 %v39
  %v64 = vunpack.c.l.bf16 %v40
  %v65 = vunpack.c.l.bf16 %v41
  %v66 = vunpack.c.l.bf16 %v42
  %v67 = vunpack.c.l.bf16 %v43
  %v68 = vunpack.c.l.bf16 %v44
  %v69 = vpack.c.bf16 %v46, %v45
  %v70 = vpack.c.bf16 %v49, %v48
  %v71 = vpack.c.bf16 %v52, %v51
  %v72 = vpack.c.bf16 %v55, %v54
  %v73 = vpack.c.bf16 %v58, %v57
  %v74 = vpack.c.bf16 %v61, %v60
  %v75 = vpack.c.bf16 %v64, %v63
  %v76 = vpack.c.bf16 %v67, %v66
  %v77 = vld [vmem:[%s1] sm:$0xff]
  %v78 = vld [vmem:[%s1 + $0x8] sm:$0xff]
  %v79 = vld [vmem:[%s1 + $0x10] sm:$0xff]
  %v80 = vld [vmem:[%s1 + $0x18] sm:$0xff]
  %v81 = vld [vmem:[%s1 + $0x20] sm:$0xff]
  %v82 = vld [vmem:[%s1 + $0x28] sm:$0xff]
  %v83 = vld [vmem:[%s1 + $0x30] sm:$0xff]
  %v84 = vld [vmem:[%s1 + $0x38] sm:$0xff]
  %v85 = vld [vmem:[%s1 + $0x40] sm:$0xff]
  %v86 = vld [vmem:[%s1 + $0x48] sm:$0xff]
  %v87 = vld [vmem:[%s1 + $0x50] sm:$0xff]
  %v88 = vld [vmem:[%s1 + $0x58] sm:$0xff]
  %v89 = vld [vmem:[%s1 + $0x60] sm:$0xff]
  %v90 = vld [vmem:[%s1 + $0x68] sm:$0xff]
  %v91 = vld [vmem:[%s1 + $0x70] sm:$0xff]
  %v92 = vld [vmem:[%s1 + $0x78] sm:$0xff]
  %v93 = vld [vmem:[%s1 + $0x80] sm:$0xff]
  %v94 = vld [vmem:[%s1 + $0x88] sm:$0xff]
  %vm119 = vcmask 1046528
  %v120 = vrot.slane %v45, 1
  %v121 = vrot.slane %v46, 1
  %v122 = vsel %vm119, %v120, %v121
  %v123 = vrot.slane %v47, 1
  %v124 = vsel %vm119, %v121, %v123
  %v125 = vrot.slane %v48, 1
  %v126 = vrot.slane %v49, 1
  %v127 = vsel %vm119, %v125, %v126
  %v128 = vrot.slane %v50, 1
  %v129 = vsel %vm119, %v126, %v128
  %v130 = vrot.slane %v51, 1
  %v131 = vrot.slane %v52, 1
  %v132 = vsel %vm119, %v130, %v131
  %v133 = vrot.slane %v53, 1
  %v134 = vsel %vm119, %v131, %v133
  %v135 = vrot.slane %v54, 1
  %v136 = vrot.slane %v55, 1
  %v137 = vsel %vm119, %v135, %v136
  %v138 = vrot.slane %v56, 1
  %v139 = vsel %vm119, %v136, %v138
  %v140 = vrot.slane %v57, 1
  %v141 = vrot.slane %v58, 1
  %v142 = vsel %vm119, %v140, %v141
  %v143 = vrot.slane %v59, 1
  %v144 = vsel %vm119, %v141, %v143
  %v145 = vrot.slane %v60, 1
  %v146 = vrot.slane %v61, 1
  %v147 = vsel %vm119, %v145, %v146
  %v148 = vrot.slane %v62, 1
  %v149 = vsel %vm119, %v146, %v148
  %v150 = vrot.slane %v63, 1
  %v151 = vrot.slane %v64, 1
  %v152 = vsel %vm119, %v150, %v151
  %v153 = vrot.slane %v65, 1
  %v154 = vsel %vm119, %v151, %v153
  %v155 = vrot.slane %v66, 1
  %v156 = vrot.slane %v67, 1
  %v157 = vsel %vm119, %v155, %v156
  %v158 = vrot.slane %v68, 1
  %v159 = vsel %vm119, %v156, %v158
  %v176 = vpack.c.bf16 %v124, %v122
  %v177 = vpack.c.bf16 %v129, %v127
  %v178 = vpack.c.bf16 %v134, %v132
  %v179 = vpack.c.bf16 %v139, %v137
  %v180 = vpack.c.bf16 %v144, %v142
  %v181 = vpack.c.bf16 %v149, %v147
  %v182 = vpack.c.bf16 %v154, %v152
  %v183 = vpack.c.bf16 %v159, %v157
  %s184 = scalar_lea.vmem %s1, 144
  %v185 = vld [vmem:[%s184] sm:$0xff]
  %v186 = vld [vmem:[%s184 + $0x8] sm:$0xff]
  %v187 = vld [vmem:[%s184 + $0x10] sm:$0xff]
  %v188 = vld [vmem:[%s184 + $0x18] sm:$0xff]
  %v189 = vld [vmem:[%s184 + $0x20] sm:$0xff]
  %v190 = vld [vmem:[%s184 + $0x28] sm:$0xff]
  %v191 = vld [vmem:[%s184 + $0x30] sm:$0xff]
  %v192 = vld [vmem:[%s184 + $0x38] sm:$0xff]
  %v193 = vld [vmem:[%s184 + $0x40] sm:$0xff]
  %v194 = vld [vmem:[%s184 + $0x48] sm:$0xff]
  %v195 = vld [vmem:[%s184 + $0x50] sm:$0xff]
  %v196 = vld [vmem:[%s184 + $0x58] sm:$0xff]
  %v197 = vld [vmem:[%s184 + $0x60] sm:$0xff]
  %v198 = vld [vmem:[%s184 + $0x68] sm:$0xff]
  %v199 = vld [vmem:[%s184 + $0x70] sm:$0xff]
  %v200 = vld [vmem:[%s184 + $0x78] sm:$0xff]
  %v201 = vld [vmem:[%s184 + $0x80] sm:$0xff]
  %v202 = vld [vmem:[%s184 + $0x88] sm:$0xff]
  %v221 = vunpack.c.l.b16 %v185
  %v222 = vunpack.c.h.b16 %v185
  %v223 = vunpack.c.l.b16 %v186
  %v224 = vunpack.c.h.b16 %v186
  %v225 = vunpack.c.l.b16 %v187
  %v226 = vunpack.c.h.b16 %v187
  %v227 = vunpack.c.l.b16 %v188
  %v228 = vunpack.c.h.b16 %v188
  %v229 = vunpack.c.l.b16 %v189
  %v230 = vunpack.c.h.b16 %v189
  %v231 = vunpack.c.l.b16 %v190
  %v232 = vunpack.c.h.b16 %v190
  %v233 = vunpack.c.l.b16 %v191
  %v234 = vunpack.c.h.b16 %v191
  %v235 = vunpack.c.l.b16 %v192
  %v236 = vunpack.c.h.b16 %v192
  %v237 = vunpack.c.l.b16 %v193
  %v238 = vunpack.c.h.b16 %v193
  %v239 = vunpack.c.l.b16 %v194
  %v240 = vunpack.c.h.b16 %v194
  %v241 = vunpack.c.l.b16 %v195
  %v242 = vunpack.c.h.b16 %v195
  %v243 = vunpack.c.l.b16 %v196
  %v244 = vunpack.c.h.b16 %v196
  %v245 = vunpack.c.l.b16 %v197
  %v246 = vunpack.c.h.b16 %v197
  %v247 = vunpack.c.l.b16 %v198
  %v248 = vunpack.c.h.b16 %v198
  %v249 = vunpack.c.l.b16 %v199
  %v250 = vunpack.c.h.b16 %v199
  %v251 = vunpack.c.l.b16 %v200
  %v252 = vunpack.c.h.b16 %v200
  %v253 = vunpack.c.l.b16 %v201
  %v254 = vunpack.c.h.b16 %v201
  %v255 = vunpack.c.l.b16 %v202
  %v256 = vunpack.c.h.b16 %v202
  %v257 = vpack.c.b16 %v225, %v221
  %v258 = vpack.c.b16 %v226, %v222
  %v259 = vpack.c.b16 %v227, %v223
  %v260 = vpack.c.b16 %v228, %v224
  %v261 = vpack.c.b16 %v233, %v229
  %v262 = vpack.c.b16 %v234, %v230
  %v263 = vpack.c.b16 %v235, %v231
  %v264 = vpack.c.b16 %v236, %v232
  %v265 = vpack.c.b16 %v241, %v237
  %v266 = vpack.c.b16 %v242, %v238
  %v267 = vpack.c.b16 %v243, %v239
  %v268 = vpack.c.b16 %v244, %v240
  %v269 = vpack.c.b16 %v249, %v245
  %v270 = vpack.c.b16 %v250, %v246
  %v271 = vpack.c.b16 %v251, %v247
  %v272 = vpack.c.b16 %v252, %v248
  %v273 = vpack.c.b16 %v253, %v253
  %v274 = vpack.c.b16 %v254, %v254
  %v275 = vpack.c.b16 %v255, %v255
  %v276 = vpack.c.b16 %v256, %v256
  %vm293 = vcmask 588800
  %v295 = vsel %vm293, %v176, 0
  %v298 = vsel %vm293, %v177, 0
  %v301 = vsel %vm293, %v178, 0
  %v304 = vsel %vm293, %v179, 0
  %v307 = vsel %vm293, %v180, 0
  %v310 = vsel %vm293, %v181, 0
  %v313 = vsel %vm293, %v182, 0
  %v316 = vsel %vm293, %v183, 0
  %vm318 = vcmask 1043456
  %v320 = vsel %vm318, %v273, 0
  %v323 = vsel %vm318, %v274, 0
  %v326 = vsel %vm318, %v275, 0
  %v329 = vsel %vm318, %v276, 0
  %331 = vmatprep.subr.bf16.mxu0 %v258
  %332 = vmatpush1.bf16.msra.mxu0 %v257
  %333 = vmatprep.subr.bf16.mxu0 %v262
  %334 = vmatpush1.bf16.msra.mxu0 %v261
  %335 = vmatprep.subr.bf16.mxu0 %v266
  %336 = vmatpush1.bf16.msra.mxu0 %v265
  %337 = vmatprep.subr.bf16.mxu0 %v270
  %338 = vmatpush1.bf16.msra.mxu0 %v269
  %339 = vmatprep.subr.bf16.mxu0 %v323
  %340 = vmatpush1.bf16.msra.mxu0 %v320
  %341 = vmatprep.subr.bf16.mxu0 0
  %342 = vmatpush1.bf16.msra.mxu0 0
  %343 = vmatprep.subr.bf16.mxu0 0
  %344 = vmatpush1.bf16.msra.mxu0 0
  %345 = vmatprep.subr.bf16.mxu0 0
  %346 = vmatpush1.bf16.msra.mxu0 0
  %347 = vmatprep.subr.bf16.mxu0 0
  %348 = vmatpush1.bf16.msra.mxu0 0
  %349 = vmatprep.subr.bf16.mxu0 0
  %350 = vmatpush1.bf16.msra.mxu0 0
  %351 = vmatprep.subr.bf16.mxu0 0
  %352 = vmatpush1.bf16.msra.mxu0 0
  %353 = vmatprep.subr.bf16.mxu0 0
  %354 = vmatpush1.bf16.msra.mxu0 0
  %355 = vmatprep.subr.bf16.mxu0 0
  %356 = vmatpush1.bf16.msra.mxu0 0
  %357 = vmatprep.subr.bf16.mxu0 0
  %358 = vmatpush1.bf16.msra.mxu0 0
  %359 = vmatprep.subr.bf16.mxu0 0
  %360 = vmatpush1.bf16.msra.mxu0 0
  %361 = vmatprep.subr.bf16.mxu0 0
  %362 = vmatpush1.bf16.msra.mxu0 0
  %363 = vmatprep.mubr.bf16.mxu0 0
  %364 = vmatmul.mubr.bf16.gmra.mrb[0].mxu0 %v295
  %v365 = vpop.f32.mrb[0].mxu0
  %v366 = vadd.f32 0.0, %v365
  %v367 = vpop.f32.mrb[0].mxu0
  %v368 = vadd.f32 0.0, %v367
  %v369 = vpop.f32.mrb[0].mxu0
  %v370 = vadd.f32 0.0, %v369
  %v371 = vpop.f32.mrb[0].mxu0
  %v372 = vadd.f32 0.0, %v371
  %373 = vmatprep.mubr.bf16.mxu0 0
  %374 = vmatmul.mubr.bf16.gmra.mrb[0].mxu0 %v298
  %v375 = vpop.f32.mrb[0].mxu0
  %v376 = vadd.f32 0.0, %v375
  %v377 = vpop.f32.mrb[0].mxu0
  %v378 = vadd.f32 0.0, %v377
  %v379 = vpop.f32.mrb[0].mxu0
  %v380 = vadd.f32 0.0, %v379
  %v381 = vpop.f32.mrb[0].mxu0
  %v382 = vadd.f32 0.0, %v381
  %383 = vmatprep.mubr.bf16.mxu0 0
  %384 = vmatmul.mubr.bf16.gmra.mrb[0].mxu0 %v301
  %v385 = vpop.f32.mrb[0].mxu0
  %v386 = vadd.f32 0.0, %v385
  %v387 = vpop.f32.mrb[0].mxu0
  %v388 = vadd.f32 0.0, %v387
  %v389 = vpop.f32.mrb[0].mxu0
  %v390 = vadd.f32 0.0, %v389
  %v391 = vpop.f32.mrb[0].mxu0
  %v392 = vadd.f32 0.0, %v391
  %393 = vmatprep.mubr.bf16.mxu0 0
  %394 = vmatmul.mubr.bf16.gmra.mrb[0].mxu0 %v304
  %v395 = vpop.f32.mrb[0].mxu0
  %v396 = vadd.f32 0.0, %v395
  %v397 = vpop.f32.mrb[0].mxu0
  %v398 = vadd.f32 0.0, %v397
  %v399 = vpop.f32.mrb[0].mxu0
  %v400 = vadd.f32 0.0, %v399
  %v401 = vpop.f32.mrb[0].mxu0
  %v402 = vadd.f32 0.0, %v401
  %403 = vmatprep.mubr.bf16.mxu0 0
  %404 = vmatmul.mubr.bf16.gmra.mrb[0].mxu0 %v307
  %v405 = vpop.f32.mrb[0].mxu0
  %v406 = vadd.f32 0.0, %v405
  %v407 = vpop.f32.mrb[0].mxu0
  %v408 = vadd.f32 0.0, %v407
  %v409 = vpop.f32.mrb[0].mxu0
  %v410 = vadd.f32 0.0, %v409
  %v411 = vpop.f32.mrb[0].mxu0
  %v412 = vadd.f32 0.0, %v411
  %413 = vmatprep.mubr.bf16.mxu0 0
  %414 = vmatmul.mubr.bf16.gmra.mrb[0].mxu0 %v310
  %v415 = vpop.f32.mrb[0].mxu0
  %v416 = vadd.f32 0.0, %v415
  %v417 = vpop.f32.mrb[0].mxu0
  %v418 = vadd.f32 0.0, %v417
  %v419 = vpop.f32.mrb[0].mxu0
  %v420 = vadd.f32 0.0, %v419
  %v421 = vpop.f32.mrb[0].mxu0
  %v422 = vadd.f32 0.0, %v421
  %423 = vmatprep.mubr.bf16.mxu0 0
  %424 = vmatmul.mubr.bf16.gmra.mrb[0].mxu0 %v313
  %v425 = vpop.f32.mrb[0].mxu0
  %v426 = vadd.f32 0.0, %v425
  %v427 = vpop.f32.mrb[0].mxu0
  %v428 = vadd.f32 0.0, %v427
  %v429 = vpop.f32.mrb[0].mxu0
  %v430 = vadd.f32 0.0, %v429
  %v431 = vpop.f32.mrb[0].mxu0
  %v432 = vadd.f32 0.0, %v431
  %433 = vmatprep.mubr.bf16.mxu0 0
  %434 = vmatmul.mubr.bf16.gmra.mrb[0].mxu0 %v316
  %v435 = vpop.f32.mrb[0].mxu0
  %v436 = vadd.f32 0.0, %v435
  %v437 = vpop.f32.mrb[0].mxu0
  %v438 = vadd.f32 0.0, %v437
  %v439 = vpop.f32.mrb[0].mxu0
  %v440 = vadd.f32 0.0, %v439
  %v441 = vpop.f32.mrb[0].mxu0
  %v442 = vadd.f32 0.0, %v441
  %443 = vdwg.mxu0
  %444 = vmatprep.subr.bf16.mxu0 %v260
  %445 = vmatpush1.bf16.msra.mxu0 %v259
  %446 = vmatprep.subr.bf16.mxu0 %v264
  %447 = vmatpush1.bf16.msra.mxu0 %v263
  %448 = vmatprep.subr.bf16.mxu0 %v268
  %449 = vmatpush1.bf16.msra.mxu0 %v267
  %450 = vmatprep.subr.bf16.mxu0 %v272
  %451 = vmatpush1.bf16.msra.mxu0 %v271
  %452 = vmatprep.subr.bf16.mxu0 %v329
  %453 = vmatpush1.bf16.msra.mxu0 %v326
  %454 = vmatprep.subr.bf16.mxu0 0
  %455 = vmatpush1.bf16.msra.mxu0 0
  %456 = vmatprep.subr.bf16.mxu0 0
  %457 = vmatpush1.bf16.msra.mxu0 0
  %458 = vmatprep.subr.bf16.mxu0 0
  %459 = vmatpush1.bf16.msra.mxu0 0
  %460 = vmatprep.subr.bf16.mxu0 0
  %461 = vmatpush1.bf16.msra.mxu0 0
  %462 = vmatprep.subr.bf16.mxu0 0
  %463 = vmatpush1.bf16.msra.mxu0 0
  %464 = vmatprep.subr.bf16.mxu0 0
  %465 = vmatpush1.bf16.msra.mxu0 0
  %466 = vmatprep.subr.bf16.mxu0 0
  %467 = vmatpush1.bf16.msra.mxu0 0
  %468 = vmatprep.subr.bf16.mxu0 0
  %469 = vmatpush1.bf16.msra.mxu0 0
  %470 = vmatprep.subr.bf16.mxu0 0
  %471 = vmatpush1.bf16.msra.mxu0 0
  %472 = vmatprep.subr.bf16.mxu0 0
  %473 = vmatpush1.bf16.msra.mxu0 0
  %474 = vmatprep.subr.bf16.mxu0 0
  %475 = vmatpush1.bf16.msra.mxu0 0
  %476 = vmatprep.mubr.bf16.mxu0 0
  %477 = vmatmul.mubr.bf16.gmra.mrb[0].mxu0 %v295
  %v478 = vpop.f32.mrb[0].mxu0
  %v479 = vadd.f32 0.0, %v478
  %v480 = vpop.f32.mrb[0].mxu0
  %v481 = vadd.f32 0.0, %v480
  %v482 = vpop.f32.mrb[0].mxu0
  %v483 = vadd.f32 0.0, %v482
  %v484 = vpop.f32.mrb[0].mxu0
  %v485 = vadd.f32 0.0, %v484
  %486 = vmatprep.mubr.bf16.mxu0 0
  %487 = vmatmul.mubr.bf16.gmra.mrb[0].mxu0 %v298
  %v488 = vpop.f32.mrb[0].mxu0
  %v489 = vadd.f32 0.0, %v488
  %v490 = vpop.f32.mrb[0].mxu0
  %v491 = vadd.f32 0.0, %v490
  %v492 = vpop.f32.mrb[0].mxu0
  %v493 = vadd.f32 0.0, %v492
  %v494 = vpop.f32.mrb[0].mxu0
  %v495 = vadd.f32 0.0, %v494
  %496 = vmatprep.mubr.bf16.mxu0 0
  %497 = vmatmul.mubr.bf16.gmra.mrb[0].mxu0 %v301
  %v498 = vpop.f32.mrb[0].mxu0
  %v499 = vadd.f32 0.0, %v498
  %v500 = vpop.f32.mrb[0].mxu0
  %v501 = vadd.f32 0.0, %v500
  %v502 = vpop.f32.mrb[0].mxu0
  %v503 = vadd.f32 0.0, %v502
  %v504 = vpop.f32.mrb[0].mxu0
  %v505 = vadd.f32 0.0, %v504
  %506 = vmatprep.mubr.bf16.mxu0 0
  %507 = vmatmul.mubr.bf16.gmra.mrb[0].mxu0 %v304
  %v508 = vpop.f32.mrb[0].mxu0
  %v509 = vadd.f32 0.0, %v508
  %v510 = vpop.f32.mrb[0].mxu0
  %v511 = vadd.f32 0.0, %v510
  %v512 = vpop.f32.mrb[0].mxu0
  %v513 = vadd.f32 0.0, %v512
  %v514 = vpop.f32.mrb[0].mxu0
  %v515 = vadd.f32 0.0, %v514
  %516 = vmatprep.mubr.bf16.mxu0 0
  %517 = vmatmul.mubr.bf16.gmra.mrb[0].mxu0 %v307
  %v518 = vpop.f32.mrb[0].mxu0
  %v519 = vadd.f32 0.0, %v518
  %v520 = vpop.f32.mrb[0].mxu0
  %v521 = vadd.f32 0.0, %v520
  %v522 = vpop.f32.mrb[0].mxu0
  %v523 = vadd.f32 0.0, %v522
  %v524 = vpop.f32.mrb[0].mxu0
  %v525 = vadd.f32 0.0, %v524
  %526 = vmatprep.mubr.bf16.mxu0 0
  %527 = vmatmul.mubr.bf16.gmra.mrb[0].mxu0 %v310
  %v528 = vpop.f32.mrb[0].mxu0
  %v529 = vadd.f32 0.0, %v528
  %v530 = vpop.f32.mrb[0].mxu0
  %v531 = vadd.f32 0.0, %v530
  %v532 = vpop.f32.mrb[0].mxu0
  %v533 = vadd.f32 0.0, %v532
  %v534 = vpop.f32.mrb[0].mxu0
  %v535 = vadd.f32 0.0, %v534
  %536 = vmatprep.mubr.bf16.mxu0 0
  %537 = vmatmul.mubr.bf16.gmra.mrb[0].mxu0 %v313
  %v538 = vpop.f32.mrb[0].mxu0
  %v539 = vadd.f32 0.0, %v538
  %v540 = vpop.f32.mrb[0].mxu0
  %v541 = vadd.f32 0.0, %v540
  %v542 = vpop.f32.mrb[0].mxu0
  %v543 = vadd.f32 0.0, %v542
  %v544 = vpop.f32.mrb[0].mxu0
  %v545 = vadd.f32 0.0, %v544
  %546 = vmatprep.mubr.bf16.mxu0 0
  %547 = vmatmul.mubr.bf16.gmra.mrb[0].mxu0 %v316
  %v548 = vpop.f32.mrb[0].mxu0
  %v549 = vadd.f32 0.0, %v548
  %v550 = vpop.f32.mrb[0].mxu0
  %v551 = vadd.f32 0.0, %v550
  %v552 = vpop.f32.mrb[0].mxu0
  %v553 = vadd.f32 0.0, %v552
  %v554 = vpop.f32.mrb[0].mxu0
  %v555 = vadd.f32 0.0, %v554
  %556 = vdwg.mxu0
  %v575 = vunpack.c.l.b16 %v77
  %v576 = vunpack.c.h.b16 %v77
  %v577 = vunpack.c.l.b16 %v78
  %v578 = vunpack.c.h.b16 %v78
  %v579 = vunpack.c.l.b16 %v79
  %v580 = vunpack.c.h.b16 %v79
  %v581 = vunpack.c.l.b16 %v80
  %v582 = vunpack.c.h.b16 %v80
  %v583 = vunpack.c.l.b16 %v81
  %v584 = vunpack.c.h.b16 %v81
  %v585 = vunpack.c.l.b16 %v82
  %v586 = vunpack.c.h.b16 %v82
  %v587 = vunpack.c.l.b16 %v83
  %v588 = vunpack.c.h.b16 %v83
  %v589 = vunpack.c.l.b16 %v84
  %v590 = vunpack.c.h.b16 %v84
  %v591 = vunpack.c.l.b16 %v85
  %v592 = vunpack.c.h.b16 %v85
  %v593 = vunpack.c.l.b16 %v86
  %v594 = vunpack.c.h.b16 %v86
  %v595 = vunpack.c.l.b16 %v87
  %v596 = vunpack.c.h.b16 %v87
  %v597 = vunpack.c.l.b16 %v88
  %v598 = vunpack.c.h.b16 %v88
  %v599 = vunpack.c.l.b16 %v89
  %v600 = vunpack.c.h.b16 %v89
  %v601 = vunpack.c.l.b16 %v90
  %v602 = vunpack.c.h.b16 %v90
  %v603 = vunpack.c.l.b16 %v91
  %v604 = vunpack.c.h.b16 %v91
  %v605 = vunpack.c.l.b16 %v92
  %v606 = vunpack.c.h.b16 %v92
  %v607 = vunpack.c.l.b16 %v93
  %v608 = vunpack.c.h.b16 %v93
  %v609 = vunpack.c.l.b16 %v94
  %v610 = vunpack.c.h.b16 %v94
  %v611 = vpack.c.b16 %v579, %v575
  %v612 = vpack.c.b16 %v580, %v576
  %v613 = vpack.c.b16 %v581, %v577
  %v614 = vpack.c.b16 %v582, %v578
  %v615 = vpack.c.b16 %v587, %v583
  %v616 = vpack.c.b16 %v588, %v584
  %v617 = vpack.c.b16 %v589, %v585
  %v618 = vpack.c.b16 %v590, %v586
  %v619 = vpack.c.b16 %v595, %v591
  %v620 = vpack.c.b16 %v596, %v592
  %v621 = vpack.c.b16 %v597, %v593
  %v622 = vpack.c.b16 %v598, %v594
  %v623 = vpack.c.b16 %v603, %v599
  %v624 = vpack.c.b16 %v604, %v600
  %v625 = vpack.c.b16 %v605, %v601
  %v626 = vpack.c.b16 %v606, %v602
  %v627 = vpack.c.b16 %v607, %v607
  %v628 = vpack.c.b16 %v608, %v608
  %v629 = vpack.c.b16 %v609, %v609
  %v630 = vpack.c.b16 %v610, %v610
  %v648 = vsel %vm293, %v69, 0
  %v651 = vsel %vm293, %v70, 0
  %v654 = vsel %vm293, %v71, 0
  %v657 = vsel %vm293, %v72, 0
  %v660 = vsel %vm293, %v73, 0
  %v663 = vsel %vm293, %v74, 0
  %v666 = vsel %vm293, %v75, 0
  %v669 = vsel %vm293, %v76, 0
  %v672 = vsel %vm318, %v627, 0
  %v675 = vsel %vm318, %v628, 0
  %v678 = vsel %vm318, %v629, 0
  %v681 = vsel %vm318, %v630, 0
  %683 = vmatprep.subr.bf16.mxu0 %v612
  %684 = vmatpush1.bf16.msra.mxu0 %v611
  %685 = vmatprep.subr.bf16.mxu0 %v616
  %686 = vmatpush1.bf16.msra.mxu0 %v615
  %687 = vmatprep.subr.bf16.mxu0 %v620
  %688 = vmatpush1.bf16.msra.mxu0 %v619
  %689 = vmatprep.subr.bf16.mxu0 %v624
  %690 = vmatpush1.bf16.msra.mxu0 %v623
  %691 = vmatprep.subr.bf16.mxu0 %v675
  %692 = vmatpush1.bf16.msra.mxu0 %v672
  %693 = vmatprep.subr.bf16.mxu0 0
  %694 = vmatpush1.bf16.msra.mxu0 0
  %695 = vmatprep.subr.bf16.mxu0 0
  %696 = vmatpush1.bf16.msra.mxu0 0
  %697 = vmatprep.subr.bf16.mxu0 0
  %698 = vmatpush1.bf16.msra.mxu0 0
  %699 = vmatprep.subr.bf16.mxu0 0
  %700 = vmatpush1.bf16.msra.mxu0 0
  %701 = vmatprep.subr.bf16.mxu0 0
  %702 = vmatpush1.bf16.msra.mxu0 0
  %703 = vmatprep.subr.bf16.mxu0 0
  %704 = vmatpush1.bf16.msra.mxu0 0
  %705 = vmatprep.subr.bf16.mxu0 0
  %706 = vmatpush1.bf16.msra.mxu0 0
  %707 = vmatprep.subr.bf16.mxu0 0
  %708 = vmatpush1.bf16.msra.mxu0 0
  %709 = vmatprep.subr.bf16.mxu0 0
  %710 = vmatpush1.bf16.msra.mxu0 0
  %711 = vmatprep.subr.bf16.mxu0 0
  %712 = vmatpush1.bf16.msra.mxu0 0
  %713 = vmatprep.subr.bf16.mxu0 0
  %714 = vmatpush1.bf16.msra.mxu0 0
  %715 = vmatprep.mubr.bf16.mxu0 0
  %716 = vmatmul.mubr.bf16.gmra.mrb[0].mxu0 %v648
  %v717 = vpop.f32.mrb[0].mxu0
  %v718 = vadd.f32 %v366, %v717
  %v719 = vpop.f32.mrb[0].mxu0
  %v720 = vadd.f32 %v368, %v719
  %v721 = vpop.f32.mrb[0].mxu0
  %v722 = vadd.f32 %v370, %v721
  %v723 = vpop.f32.mrb[0].mxu0
  %v724 = vadd.f32 %v372, %v723
  %725 = vmatprep.mubr.bf16.mxu0 0
  %726 = vmatmul.mubr.bf16.gmra.mrb[0].mxu0 %v651
  %v727 = vpop.f32.mrb[0].mxu0
  %v728 = vadd.f32 %v376, %v727
  %v729 = vpop.f32.mrb[0].mxu0
  %v730 = vadd.f32 %v378, %v729
  %v731 = vpop.f32.mrb[0].mxu0
  %v732 = vadd.f32 %v380, %v731
  %v733 = vpop.f32.mrb[0].mxu0
  %v734 = vadd.f32 %v382, %v733
  %735 = vmatprep.mubr.bf16.mxu0 0
  %736 = vmatmul.mubr.bf16.gmra.mrb[0].mxu0 %v654
  %v737 = vpop.f32.mrb[0].mxu0
  %v738 = vadd.f32 %v386, %v737
  %v739 = vpop.f32.mrb[0].mxu0
  %v740 = vadd.f32 %v388, %v739
  %v741 = vpop.f32.mrb[0].mxu0
  %v742 = vadd.f32 %v390, %v741
  %v743 = vpop.f32.mrb[0].mxu0
  %v744 = vadd.f32 %v392, %v743
  %745 = vmatprep.mubr.bf16.mxu0 0
  %746 = vmatmul.mubr.bf16.gmra.mrb[0].mxu0 %v657
  %v747 = vpop.f32.mrb[0].mxu0
  %v748 = vadd.f32 %v396, %v747
  %v749 = vpop.f32.mrb[0].mxu0
  %v750 = vadd.f32 %v398, %v749
  %v751 = vpop.f32.mrb[0].mxu0
  %v752 = vadd.f32 %v400, %v751
  %v753 = vpop.f32.mrb[0].mxu0
  %v754 = vadd.f32 %v402, %v753
  %755 = vmatprep.mubr.bf16.mxu0 0
  %756 = vmatmul.mubr.bf16.gmra.mrb[0].mxu0 %v660
  %v757 = vpop.f32.mrb[0].mxu0
  %v758 = vadd.f32 %v406, %v757
  %v759 = vpop.f32.mrb[0].mxu0
  %v760 = vadd.f32 %v408, %v759
  %v761 = vpop.f32.mrb[0].mxu0
  %v762 = vadd.f32 %v410, %v761
  %v763 = vpop.f32.mrb[0].mxu0
  %v764 = vadd.f32 %v412, %v763
  %765 = vmatprep.mubr.bf16.mxu0 0
  %766 = vmatmul.mubr.bf16.gmra.mrb[0].mxu0 %v663
  %v767 = vpop.f32.mrb[0].mxu0
  %v768 = vadd.f32 %v416, %v767
  %v769 = vpop.f32.mrb[0].mxu0
  %v770 = vadd.f32 %v418, %v769
  %v771 = vpop.f32.mrb[0].mxu0
  %v772 = vadd.f32 %v420, %v771
  %v773 = vpop.f32.mrb[0].mxu0
  %v774 = vadd.f32 %v422, %v773
  %775 = vmatprep.mubr.bf16.mxu0 0
  %776 = vmatmul.mubr.bf16.gmra.mrb[0].mxu0 %v666
  %v777 = vpop.f32.mrb[0].mxu0
  %v778 = vadd.f32 %v426, %v777
  %v779 = vpop.f32.mrb[0].mxu0
  %v780 = vadd.f32 %v428, %v779
  %v781 = vpop.f32.mrb[0].mxu0
  %v782 = vadd.f32 %v430, %v781
  %v783 = vpop.f32.mrb[0].mxu0
  %v784 = vadd.f32 %v432, %v783
  %785 = vmatprep.mubr.bf16.mxu0 0
  %786 = vmatmul.mubr.bf16.gmra.mrb[0].mxu0 %v669
  %v787 = vpop.f32.mrb[0].mxu0
  %v788 = vadd.f32 %v436, %v787
  %v789 = vpop.f32.mrb[0].mxu0
  %v790 = vadd.f32 %v438, %v789
  %v791 = vpop.f32.mrb[0].mxu0
  %v792 = vadd.f32 %v440, %v791
  %v793 = vpop.f32.mrb[0].mxu0
  %v794 = vadd.f32 %v442, %v793
  %795 = vdwg.mxu0
  %796 = vmatprep.subr.bf16.mxu0 %v614
  %797 = vmatpush1.bf16.msra.mxu0 %v613
  %798 = vmatprep.subr.bf16.mxu0 %v618
  %799 = vmatpush1.bf16.msra.mxu0 %v617
  %800 = vmatprep.subr.bf16.mxu0 %v622
  %801 = vmatpush1.bf16.msra.mxu0 %v621
  %802 = vmatprep.subr.bf16.mxu0 %v626
  %803 = vmatpush1.bf16.msra.mxu0 %v625
  %804 = vmatprep.subr.bf16.mxu0 %v681
  %805 = vmatpush1.bf16.msra.mxu0 %v678
  %806 = vmatprep.subr.bf16.mxu0 0
  %807 = vmatpush1.bf16.msra.mxu0 0
  %808 = vmatprep.subr.bf16.mxu0 0
  %809 = vmatpush1.bf16.msra.mxu0 0
  %810 = vmatprep.subr.bf16.mxu0 0
  %811 = vmatpush1.bf16.msra.mxu0 0
  %812 = vmatprep.subr.bf16.mxu0 0
  %813 = vmatpush1.bf16.msra.mxu0 0
  %814 = vmatprep.subr.bf16.mxu0 0
  %815 = vmatpush1.bf16.msra.mxu0 0
  %816 = vmatprep.subr.bf16.mxu0 0
  %817 = vmatpush1.bf16.msra.mxu0 0
  %818 = vmatprep.subr.bf16.mxu0 0
  %819 = vmatpush1.bf16.msra.mxu0 0
  %820 = vmatprep.subr.bf16.mxu0 0
  %821 = vmatpush1.bf16.msra.mxu0 0
  %822 = vmatprep.subr.bf16.mxu0 0
  %823 = vmatpush1.bf16.msra.mxu0 0
  %824 = vmatprep.subr.bf16.mxu0 0
  %825 = vmatpush1.bf16.msra.mxu0 0
  %826 = vmatprep.subr.bf16.mxu0 0
  %827 = vmatpush1.bf16.msra.mxu0 0
  %828 = vmatprep.mubr.bf16.mxu0 0
  %829 = vmatmul.mubr.bf16.gmra.mrb[0].mxu0 %v648
  %v830 = vpop.f32.mrb[0].mxu0
  %v831 = vadd.f32 %v479, %v830
  %v832 = vpop.f32.mrb[0].mxu0
  %v833 = vadd.f32 %v481, %v832
  %v834 = vpop.f32.mrb[0].mxu0
  %v835 = vadd.f32 %v483, %v834
  %v836 = vpop.f32.mrb[0].mxu0
  %v837 = vadd.f32 %v485, %v836
  %838 = vmatprep.mubr.bf16.mxu0 0
  %839 = vmatmul.mubr.bf16.gmra.mrb[0].mxu0 %v651
  %v840 = vpop.f32.mrb[0].mxu0
  %v841 = vadd.f32 %v489, %v840
  %v842 = vpop.f32.mrb[0].mxu0
  %v843 = vadd.f32 %v491, %v842
  %v844 = vpop.f32.mrb[0].mxu0
  %v845 = vadd.f32 %v493, %v844
  %v846 = vpop.f32.mrb[0].mxu0
  %v847 = vadd.f32 %v495, %v846
  %848 = vmatprep.mubr.bf16.mxu0 0
  %849 = vmatmul.mubr.bf16.gmra.mrb[0].mxu0 %v654
  %v850 = vpop.f32.mrb[0].mxu0
  %v851 = vadd.f32 %v499, %v850
  %v852 = vpop.f32.mrb[0].mxu0
  %v853 = vadd.f32 %v501, %v852
  %v854 = vpop.f32.mrb[0].mxu0
  %v855 = vadd.f32 %v503, %v854
  %v856 = vpop.f32.mrb[0].mxu0
  %v857 = vadd.f32 %v505, %v856
  %858 = vmatprep.mubr.bf16.mxu0 0
  %859 = vmatmul.mubr.bf16.gmra.mrb[0].mxu0 %v657
  %v860 = vpop.f32.mrb[0].mxu0
  %v861 = vadd.f32 %v509, %v860
  %v862 = vpop.f32.mrb[0].mxu0
  %v863 = vadd.f32 %v511, %v862
  %v864 = vpop.f32.mrb[0].mxu0
  %v865 = vadd.f32 %v513, %v864
  %v866 = vpop.f32.mrb[0].mxu0
  %v867 = vadd.f32 %v515, %v866
  %868 = vmatprep.mubr.bf16.mxu0 0
  %869 = vmatmul.mubr.bf16.gmra.mrb[0].mxu0 %v660
  %v870 = vpop.f32.mrb[0].mxu0
  %v871 = vadd.f32 %v519, %v870
  %v872 = vpop.f32.mrb[0].mxu0
  %v873 = vadd.f32 %v521, %v872
  %v874 = vpop.f32.mrb[0].mxu0
  %v875 = vadd.f32 %v523, %v874
  %v876 = vpop.f32.mrb[0].mxu0
  %v877 = vadd.f32 %v525, %v876
  %878 = vmatprep.mubr.bf16.mxu0 0
  %879 = vmatmul.mubr.bf16.gmra.mrb[0].mxu0 %v663
  %v880 = vpop.f32.mrb[0].mxu0
  %v881 = vadd.f32 %v529, %v880
  %v882 = vpop.f32.mrb[0].mxu0
  %v883 = vadd.f32 %v531, %v882
  %v884 = vpop.f32.mrb[0].mxu0
  %v885 = vadd.f32 %v533, %v884
  %v886 = vpop.f32.mrb[0].mxu0
  %v887 = vadd.f32 %v535, %v886
  %888 = vmatprep.mubr.bf16.mxu0 0
  %889 = vmatmul.mubr.bf16.gmra.mrb[0].mxu0 %v666
  %v890 = vpop.f32.mrb[0].mxu0
  %v891 = vadd.f32 %v539, %v890
  %v892 = vpop.f32.mrb[0].mxu0
  %v893 = vadd.f32 %v541, %v892
  %v894 = vpop.f32.mrb[0].mxu0
  %v895 = vadd.f32 %v543, %v894
  %v896 = vpop.f32.mrb[0].mxu0
  %v897 = vadd.f32 %v545, %v896
  %898 = vmatprep.mubr.bf16.mxu0 0
  %899 = vmatmul.mubr.bf16.gmra.mrb[0].mxu0 %v669
  %v900 = vpop.f32.mrb[0].mxu0
  %v901 = vadd.f32 %v549, %v900
  %v902 = vpop.f32.mrb[0].mxu0
  %v903 = vadd.f32 %v551, %v902
  %v904 = vpop.f32.mrb[0].mxu0
  %v905 = vadd.f32 %v553, %v904
  %v906 = vpop.f32.mrb[0].mxu0
  %v907 = vadd.f32 %v555, %v906
  %908 = vdwg.mxu0
  %vm909 = vcmask 1045504
  %v910 = vrot.slane %v45, 2
  %v911 = vrot.slane %v46, 2
  %v912 = vsel %vm909, %v910, %v911
  %v913 = vrot.slane %v47, 2
  %v914 = vsel %vm909, %v911, %v913
  %v915 = vrot.slane %v48, 2
  %v916 = vrot.slane %v49, 2
  %v917 = vsel %vm909, %v915, %v916
  %v918 = vrot.slane %v50, 2
  %v919 = vsel %vm909, %v916, %v918
  %v920 = vrot.slane %v51, 2
  %v921 = vrot.slane %v52, 2
  %v922 = vsel %vm909, %v920, %v921
  %v923 = vrot.slane %v53, 2
  %v924 = vsel %vm909, %v921, %v923
  %v925 = vrot.slane %v54, 2
  %v926 = vrot.slane %v55, 2
  %v927 = vsel %vm909, %v925, %v926
  %v928 = vrot.slane %v56, 2
  %v929 = vsel %vm909, %v926, %v928
  %v930 = vrot.slane %v57, 2
  %v931 = vrot.slane %v58, 2
  %v932 = vsel %vm909, %v930, %v931
  %v933 = vrot.slane %v59, 2
  %v934 = vsel %vm909, %v931, %v933
  %v935 = vrot.slane %v60, 2
  %v936 = vrot.slane %v61, 2
  %v937 = vsel %vm909, %v935, %v936
  %v938 = vrot.slane %v62, 2
  %v939 = vsel %vm909, %v936, %v938
  %v940 = vrot.slane %v63, 2
  %v941 = vrot.slane %v64, 2
  %v942 = vsel %vm909, %v940, %v941
  %v943 = vrot.slane %v65, 2
  %v944 = vsel %vm909, %v941, %v943
  %v945 = vrot.slane %v66, 2
  %v946 = vrot.slane %v67, 2
  %v947 = vsel %vm909, %v945, %v946
  %v948 = vrot.slane %v68, 2
  %v949 = vsel %vm909, %v946, %v948
  %v966 = vpack.c.bf16 %v914, %v912
  %v967 = vpack.c.bf16 %v919, %v917
  %v968 = vpack.c.bf16 %v924, %v922
  %v969 = vpack.c.bf16 %v929, %v927
  %v970 = vpack.c.bf16 %v934, %v932
  %v971 = vpack.c.bf16 %v939, %v937
  %v972 = vpack.c.bf16 %v944, %v942
  %v973 = vpack.c.bf16 %v949, %v947
  %s974 = scalar_lea.vmem %s1, 288
  %v975 = vld [vmem:[%s974] sm:$0xff]
  %v976 = vld [vmem:[%s974 + $0x8] sm:$0xff]
  %v977 = vld [vmem:[%s974 + $0x10] sm:$0xff]
  %v978 = vld [vmem:[%s974 + $0x18] sm:$0xff]
  %v979 = vld [vmem:[%s974 + $0x20] sm:$0xff]
  %v980 = vld [vmem:[%s974 + $0x28] sm:$0xff]
  %v981 = vld [vmem:[%s974 + $0x30] sm:$0xff]
  %v982 = vld [vmem:[%s974 + $0x38] sm:$0xff]
  %v983 = vld [vmem:[%s974 + $0x40] sm:$0xff]
  %v984 = vld [vmem:[%s974 + $0x48] sm:$0xff]
  %v985 = vld [vmem:[%s974 + $0x50] sm:$0xff]
  %v986 = vld [vmem:[%s974 + $0x58] sm:$0xff]
  %v987 = vld [vmem:[%s974 + $0x60] sm:$0xff]
  %v988 = vld [vmem:[%s974 + $0x68] sm:$0xff]
  %v989 = vld [vmem:[%s974 + $0x70] sm:$0xff]
  %v990 = vld [vmem:[%s974 + $0x78] sm:$0xff]
  %v991 = vld [vmem:[%s974 + $0x80] sm:$0xff]
  %v992 = vld [vmem:[%s974 + $0x88] sm:$0xff]
  %v1011 = vunpack.c.l.b16 %v975
  %v1012 = vunpack.c.h.b16 %v975
  %v1013 = vunpack.c.l.b16 %v976
  %v1014 = vunpack.c.h.b16 %v976
  %v1015 = vunpack.c.l.b16 %v977
  %v1016 = vunpack.c.h.b16 %v977
  %v1017 = vunpack.c.l.b16 %v978
  %v1018 = vunpack.c.h.b16 %v978
  %v1019 = vunpack.c.l.b16 %v979
  %v1020 = vunpack.c.h.b16 %v979
  %v1021 = vunpack.c.l.b16 %v980
  %v1022 = vunpack.c.h.b16 %v980
  %v1023 = vunpack.c.l.b16 %v981
  %v1024 = vunpack.c.h.b16 %v981
  %v1025 = vunpack.c.l.b16 %v982
  %v1026 = vunpack.c.h.b16 %v982
  %v1027 = vunpack.c.l.b16 %v983
  %v1028 = vunpack.c.h.b16 %v983
  %v1029 = vunpack.c.l.b16 %v984
  %v1030 = vunpack.c.h.b16 %v984
  %v1031 = vunpack.c.l.b16 %v985
  %v1032 = vunpack.c.h.b16 %v985
  %v1033 = vunpack.c.l.b16 %v986
  %v1034 = vunpack.c.h.b16 %v986
  %v1035 = vunpack.c.l.b16 %v987
  %v1036 = vunpack.c.h.b16 %v987
  %v1037 = vunpack.c.l.b16 %v988
  %v1038 = vunpack.c.h.b16 %v988
  %v1039 = vunpack.c.l.b16 %v989
  %v1040 = vunpack.c.h.b16 %v989
  %v1041 = vunpack.c.l.b16 %v990
  %v1042 = vunpack.c.h.b16 %v990
  %v1043 = vunpack.c.l.b16 %v991
  %v1044 = vunpack.c.h.b16 %v991
  %v1045 = vunpack.c.l.b16 %v992
  %v1046 = vunpack.c.h.b16 %v992
  %v1047 = vpack.c.b16 %v1015, %v1011
  %v1048 = vpack.c.b16 %v1016, %v1012
  %v1049 = vpack.c.b16 %v1017, %v1013
  %v1050 = vpack.c.b16 %v1018, %v1014
  %v1051 = vpack.c.b16 %v1023, %v1019
  %v1052 = vpack.c.b16 %v1024, %v1020
  %v1053 = vpack.c.b16 %v1025, %v1021
  %v1054 = vpack.c.b16 %v1026, %v1022
  %v1055 = vpack.c.b16 %v1031, %v1027
  %v1056 = vpack.c.b16 %v1032, %v1028
  %v1057 = vpack.c.b16 %v1033, %v1029
  %v1058 = vpack.c.b16 %v1034, %v1030
  %v1059 = vpack.c.b16 %v1039, %v1035
  %v1060 = vpack.c.b16 %v1040, %v1036
  %v1061 = vpack.c.b16 %v1041, %v1037
  %v1062 = vpack.c.b16 %v1042, %v1038
  %v1063 = vpack.c.b16 %v1043, %v1043
  %v1064 = vpack.c.b16 %v1044, %v1044
  %v1065 = vpack.c.b16 %v1045, %v1045
  %v1066 = vpack.c.b16 %v1046, %v1046
  %v1084 = vsel %vm293, %v966, 0
  %v1087 = vsel %vm293, %v967, 0
  %v1090 = vsel %vm293, %v968, 0
  %v1093 = vsel %vm293, %v969, 0
  %v1096 = vsel %vm293, %v970, 0
  %v1099 = vsel %vm293, %v971, 0
  %v1102 = vsel %vm293, %v972, 0
  %v1105 = vsel %vm293, %v973, 0
  %v1108 = vsel %vm318, %v1063, 0
  %v1111 = vsel %vm318, %v1064, 0
  %v1114 = vsel %vm318, %v1065, 0
  %v1117 = vsel %vm318, %v1066, 0
  %1119 = vmatprep.subr.bf16.mxu0 %v1048
  %1120 = vmatpush1.bf16.msra.mxu0 %v1047
  %1121 = vmatprep.subr.bf16.mxu0 %v1052
  %1122 = vmatpush1.bf16.msra.mxu0 %v1051
  %1123 = vmatprep.subr.bf16.mxu0 %v1056
  %1124 = vmatpush1.bf16.msra.mxu0 %v1055
  %1125 = vmatprep.subr.bf16.mxu0 %v1060
  %1126 = vmatpush1.bf16.msra.mxu0 %v1059
  %1127 = vmatprep.subr.bf16.mxu0 %v1111
  %1128 = vmatpush1.bf16.msra.mxu0 %v1108
  %1129 = vmatprep.subr.bf16.mxu0 0
  %1130 = vmatpush1.bf16.msra.mxu0 0
  %1131 = vmatprep.subr.bf16.mxu0 0
  %1132 = vmatpush1.bf16.msra.mxu0 0
  %1133 = vmatprep.subr.bf16.mxu0 0
  %1134 = vmatpush1.bf16.msra.mxu0 0
  %1135 = vmatprep.subr.bf16.mxu0 0
  %1136 = vmatpush1.bf16.msra.mxu0 0
  %1137 = vmatprep.subr.bf16.mxu0 0
  %1138 = vmatpush1.bf16.msra.mxu0 0
  %1139 = vmatprep.subr.bf16.mxu0 0
  %1140 = vmatpush1.bf16.msra.mxu0 0
  %1141 = vmatprep.subr.bf16.mxu0 0
  %1142 = vmatpush1.bf16.msra.mxu0 0
  %1143 = vmatprep.subr.bf16.mxu0 0
  %1144 = vmatpush1.bf16.msra.mxu0 0
  %1145 = vmatprep.subr.bf16.mxu0 0
  %1146 = vmatpush1.bf16.msra.mxu0 0
  %1147 = vmatprep.subr.bf16.mxu0 0
  %1148 = vmatpush1.bf16.msra.mxu0 0
  %1149 = vmatprep.subr.bf16.mxu0 0
  %1150 = vmatpush1.bf16.msra.mxu0 0
  %1151 = vmatprep.mubr.bf16.mxu0 0
  %1152 = vmatmul.mubr.bf16.gmra.mrb[0].mxu0 %v1084
  %v1153 = vpop.f32.mrb[0].mxu0
  %v1154 = vadd.f32 0.0, %v1153
  %v1155 = vpop.f32.mrb[0].mxu0
  %v1156 = vadd.f32 0.0, %v1155
  %v1157 = vpop.f32.mrb[0].mxu0
  %v1158 = vadd.f32 0.0, %v1157
  %v1159 = vpop.f32.mrb[0].mxu0
  %v1160 = vadd.f32 0.0, %v1159
  %1161 = vmatprep.mubr.bf16.mxu0 0
  %1162 = vmatmul.mubr.bf16.gmra.mrb[0].mxu0 %v1087
  %v1163 = vpop.f32.mrb[0].mxu0
  %v1164 = vadd.f32 0.0, %v1163
  %v1165 = vpop.f32.mrb[0].mxu0
  %v1166 = vadd.f32 0.0, %v1165
  %v1167 = vpop.f32.mrb[0].mxu0
  %v1168 = vadd.f32 0.0, %v1167
  %v1169 = vpop.f32.mrb[0].mxu0
  %v1170 = vadd.f32 0.0, %v1169
  %1171 = vmatprep.mubr.bf16.mxu0 0
  %1172 = vmatmul.mubr.bf16.gmra.mrb[0].mxu0 %v1090
  %v1173 = vpop.f32.mrb[0].mxu0
  %v1174 = vadd.f32 0.0, %v1173
  %v1175 = vpop.f32.mrb[0].mxu0
  %v1176 = vadd.f32 0.0, %v1175
  %v1177 = vpop.f32.mrb[0].mxu0
  %v1178 = vadd.f32 0.0, %v1177
  %v1179 = vpop.f32.mrb[0].mxu0
  %v1180 = vadd.f32 0.0, %v1179
  %1181 = vmatprep.mubr.bf16.mxu0 0
  %1182 = vmatmul.mubr.bf16.gmra.mrb[0].mxu0 %v1093
  %v1183 = vpop.f32.mrb[0].mxu0
  %v1184 = vadd.f32 0.0, %v1183
  %v1185 = vpop.f32.mrb[0].mxu0
  %v1186 = vadd.f32 0.0, %v1185
  %v1187 = vpop.f32.mrb[0].mxu0
  %v1188 = vadd.f32 0.0, %v1187
  %v1189 = vpop.f32.mrb[0].mxu0
  %v1190 = vadd.f32 0.0, %v1189
  %1191 = vmatprep.mubr.bf16.mxu0 0
  %1192 = vmatmul.mubr.bf16.gmra.mrb[0].mxu0 %v1096
  %v1193 = vpop.f32.mrb[0].mxu0
  %v1194 = vadd.f32 0.0, %v1193
  %v1195 = vpop.f32.mrb[0].mxu0
  %v1196 = vadd.f32 0.0, %v1195
  %v1197 = vpop.f32.mrb[0].mxu0
  %v1198 = vadd.f32 0.0, %v1197
  %v1199 = vpop.f32.mrb[0].mxu0
  %v1200 = vadd.f32 0.0, %v1199
  %1201 = vmatprep.mubr.bf16.mxu0 0
  %1202 = vmatmul.mubr.bf16.gmra.mrb[0].mxu0 %v1099
  %v1203 = vpop.f32.mrb[0].mxu0
  %v1204 = vadd.f32 0.0, %v1203
  %v1205 = vpop.f32.mrb[0].mxu0
  %v1206 = vadd.f32 0.0, %v1205
  %v1207 = vpop.f32.mrb[0].mxu0
  %v1208 = vadd.f32 0.0, %v1207
  %v1209 = vpop.f32.mrb[0].mxu0
  %v1210 = vadd.f32 0.0, %v1209
  %1211 = vmatprep.mubr.bf16.mxu0 0
  %1212 = vmatmul.mubr.bf16.gmra.mrb[0].mxu0 %v1102
  %v1213 = vpop.f32.mrb[0].mxu0
  %v1214 = vadd.f32 0.0, %v1213
  %v1215 = vpop.f32.mrb[0].mxu0
  %v1216 = vadd.f32 0.0, %v1215
  %v1217 = vpop.f32.mrb[0].mxu0
  %v1218 = vadd.f32 0.0, %v1217
  %v1219 = vpop.f32.mrb[0].mxu0
  %v1220 = vadd.f32 0.0, %v1219
  %1221 = vmatprep.mubr.bf16.mxu0 0
  %1222 = vmatmul.mubr.bf16.gmra.mrb[0].mxu0 %v1105
  %v1223 = vpop.f32.mrb[0].mxu0
  %v1224 = vadd.f32 0.0, %v1223
  %v1225 = vpop.f32.mrb[0].mxu0
  %v1226 = vadd.f32 0.0, %v1225
  %v1227 = vpop.f32.mrb[0].mxu0
  %v1228 = vadd.f32 0.0, %v1227
  %v1229 = vpop.f32.mrb[0].mxu0
  %v1230 = vadd.f32 0.0, %v1229
  %1231 = vdwg.mxu0
  %1232 = vmatprep.subr.bf16.mxu0 %v1050
  %1233 = vmatpush1.bf16.msra.mxu0 %v1049
  %1234 = vmatprep.subr.bf16.mxu0 %v1054
  %1235 = vmatpush1.bf16.msra.mxu0 %v1053
  %1236 = vmatprep.subr.bf16.mxu0 %v1058
  %1237 = vmatpush1.bf16.msra.mxu0 %v1057
  %1238 = vmatprep.subr.bf16.mxu0 %v1062
  %1239 = vmatpush1.bf16.msra.mxu0 %v1061
  %1240 = vmatprep.subr.bf16.mxu0 %v1117
  %1241 = vmatpush1.bf16.msra.mxu0 %v1114
  %1242 = vmatprep.subr.bf16.mxu0 0
  %1243 = vmatpush1.bf16.msra.mxu0 0
  %1244 = vmatprep.subr.bf16.mxu0 0
  %1245 = vmatpush1.bf16.msra.mxu0 0
  %1246 = vmatprep.subr.bf16.mxu0 0
  %1247 = vmatpush1.bf16.msra.mxu0 0
  %1248 = vmatprep.subr.bf16.mxu0 0
  %1249 = vmatpush1.bf16.msra.mxu0 0
  %1250 = vmatprep.subr.bf16.mxu0 0
  %1251 = vmatpush1.bf16.msra.mxu0 0
  %1252 = vmatprep.subr.bf16.mxu0 0
  %1253 = vmatpush1.bf16.msra.mxu0 0
  %1254 = vmatprep.subr.bf16.mxu0 0
  %1255 = vmatpush1.bf16.msra.mxu0 0
  %1256 = vmatprep.subr.bf16.mxu0 0
  %1257 = vmatpush1.bf16.msra.mxu0 0
  %1258 = vmatprep.subr.bf16.mxu0 0
  %1259 = vmatpush1.bf16.msra.mxu0 0
  %1260 = vmatprep.subr.bf16.mxu0 0
  %1261 = vmatpush1.bf16.msra.mxu0 0
  %1262 = vmatprep.subr.bf16.mxu0 0
  %1263 = vmatpush1.bf16.msra.mxu0 0
  %1264 = vmatprep.mubr.bf16.mxu0 0
  %1265 = vmatmul.mubr.bf16.gmra.mrb[0].mxu0 %v1084
  %v1266 = vpop.f32.mrb[0].mxu0
  %v1267 = vadd.f32 0.0, %v1266
  %v1268 = vpop.f32.mrb[0].mxu0
  %v1269 = vadd.f32 0.0, %v1268
  %v1270 = vpop.f32.mrb[0].mxu0
  %v1271 = vadd.f32 0.0, %v1270
  %v1272 = vpop.f32.mrb[0].mxu0
  %v1273 = vadd.f32 0.0, %v1272
  %1274 = vmatprep.mubr.bf16.mxu0 0
  %1275 = vmatmul.mubr.bf16.gmra.mrb[0].mxu0 %v1087
  %v1276 = vpop.f32.mrb[0].mxu0
  %v1277 = vadd.f32 0.0, %v1276
  %v1278 = vpop.f32.mrb[0].mxu0
  %v1279 = vadd.f32 0.0, %v1278
  %v1280 = vpop.f32.mrb[0].mxu0
  %v1281 = vadd.f32 0.0, %v1280
  %v1282 = vpop.f32.mrb[0].mxu0
  %v1283 = vadd.f32 0.0, %v1282
  %1284 = vmatprep.mubr.bf16.mxu0 0
  %1285 = vmatmul.mubr.bf16.gmra.mrb[0].mxu0 %v1090
  %v1286 = vpop.f32.mrb[0].mxu0
  %v1287 = vadd.f32 0.0, %v1286
  %v1288 = vpop.f32.mrb[0].mxu0
  %v1289 = vadd.f32 0.0, %v1288
  %v1290 = vpop.f32.mrb[0].mxu0
  %v1291 = vadd.f32 0.0, %v1290
  %v1292 = vpop.f32.mrb[0].mxu0
  %v1293 = vadd.f32 0.0, %v1292
  %1294 = vmatprep.mubr.bf16.mxu0 0
  %1295 = vmatmul.mubr.bf16.gmra.mrb[0].mxu0 %v1093
  %v1296 = vpop.f32.mrb[0].mxu0
  %v1297 = vadd.f32 0.0, %v1296
  %v1298 = vpop.f32.mrb[0].mxu0
  %v1299 = vadd.f32 0.0, %v1298
  %v1300 = vpop.f32.mrb[0].mxu0
  %v1301 = vadd.f32 0.0, %v1300
  %v1302 = vpop.f32.mrb[0].mxu0
  %v1303 = vadd.f32 0.0, %v1302
  %1304 = vmatprep.mubr.bf16.mxu0 0
  %1305 = vmatmul.mubr.bf16.gmra.mrb[0].mxu0 %v1096
  %v1306 = vpop.f32.mrb[0].mxu0
  %v1307 = vadd.f32 0.0, %v1306
  %v1308 = vpop.f32.mrb[0].mxu0
  %v1309 = vadd.f32 0.0, %v1308
  %v1310 = vpop.f32.mrb[0].mxu0
  %v1311 = vadd.f32 0.0, %v1310
  %v1312 = vpop.f32.mrb[0].mxu0
  %v1313 = vadd.f32 0.0, %v1312
  %1314 = vmatprep.mubr.bf16.mxu0 0
  %1315 = vmatmul.mubr.bf16.gmra.mrb[0].mxu0 %v1099
  %v1316 = vpop.f32.mrb[0].mxu0
  %v1317 = vadd.f32 0.0, %v1316
  %v1318 = vpop.f32.mrb[0].mxu0
  %v1319 = vadd.f32 0.0, %v1318
  %v1320 = vpop.f32.mrb[0].mxu0
  %v1321 = vadd.f32 0.0, %v1320
  %v1322 = vpop.f32.mrb[0].mxu0
  %v1323 = vadd.f32 0.0, %v1322
  %1324 = vmatprep.mubr.bf16.mxu0 0
  %1325 = vmatmul.mubr.bf16.gmra.mrb[0].mxu0 %v1102
  %v1326 = vpop.f32.mrb[0].mxu0
  %v1327 = vadd.f32 0.0, %v1326
  %v1328 = vpop.f32.mrb[0].mxu0
  %v1329 = vadd.f32 0.0, %v1328
  %v1330 = vpop.f32.mrb[0].mxu0
  %v1331 = vadd.f32 0.0, %v1330
  %v1332 = vpop.f32.mrb[0].mxu0
  %v1333 = vadd.f32 0.0, %v1332
  %1334 = vmatprep.mubr.bf16.mxu0 0
  %1335 = vmatmul.mubr.bf16.gmra.mrb[0].mxu0 %v1105
  %v1336 = vpop.f32.mrb[0].mxu0
  %v1337 = vadd.f32 0.0, %v1336
  %v1338 = vpop.f32.mrb[0].mxu0
  %v1339 = vadd.f32 0.0, %v1338
  %v1340 = vpop.f32.mrb[0].mxu0
  %v1341 = vadd.f32 0.0, %v1340
  %v1342 = vpop.f32.mrb[0].mxu0
  %v1343 = vadd.f32 0.0, %v1342
  %1344 = vdwg.mxu0
  %v1345 = vadd.f32 %v718, %v1154
  %v1346 = vadd.f32 %v720, %v1156
  %v1347 = vadd.f32 %v831, %v1267
  %v1348 = vadd.f32 %v833, %v1269
  %v1349 = vadd.f32 %v722, %v1158
  %v1350 = vadd.f32 %v724, %v1160
  %v1351 = vadd.f32 %v835, %v1271
  %v1352 = vadd.f32 %v837, %v1273
  %v1353 = vadd.f32 %v728, %v1164
  %v1354 = vadd.f32 %v730, %v1166
  %v1355 = vadd.f32 %v841, %v1277
  %v1356 = vadd.f32 %v843, %v1279
  %v1357 = vadd.f32 %v732, %v1168
  %v1358 = vadd.f32 %v734, %v1170
  %v1359 = vadd.f32 %v845, %v1281
  %v1360 = vadd.f32 %v847, %v1283
  %v1361 = vadd.f32 %v738, %v1174
  %v1362 = vadd.f32 %v740, %v1176
  %v1363 = vadd.f32 %v851, %v1287
  %v1364 = vadd.f32 %v853, %v1289
  %v1365 = vadd.f32 %v742, %v1178
  %v1366 = vadd.f32 %v744, %v1180
  %v1367 = vadd.f32 %v855, %v1291
  %v1368 = vadd.f32 %v857, %v1293
  %v1369 = vadd.f32 %v748, %v1184
  %v1370 = vadd.f32 %v750, %v1186
  %v1371 = vadd.f32 %v861, %v1297
  %v1372 = vadd.f32 %v863, %v1299
  %v1373 = vadd.f32 %v752, %v1188
  %v1374 = vadd.f32 %v754, %v1190
  %v1375 = vadd.f32 %v865, %v1301
  %v1376 = vadd.f32 %v867, %v1303
  %v1377 = vadd.f32 %v758, %v1194
  %v1378 = vadd.f32 %v760, %v1196
  %v1379 = vadd.f32 %v871, %v1307
  %v1380 = vadd.f32 %v873, %v1309
  %v1381 = vadd.f32 %v762, %v1198
  %v1382 = vadd.f32 %v764, %v1200
  %v1383 = vadd.f32 %v875, %v1311
  %v1384 = vadd.f32 %v877, %v1313
  %v1385 = vadd.f32 %v768, %v1204
  %v1386 = vadd.f32 %v770, %v1206
  %v1387 = vadd.f32 %v881, %v1317
  %v1388 = vadd.f32 %v883, %v1319
  %v1389 = vadd.f32 %v772, %v1208
  %v1390 = vadd.f32 %v774, %v1210
  %v1391 = vadd.f32 %v885, %v1321
  %v1392 = vadd.f32 %v887, %v1323
  %v1393 = vadd.f32 %v778, %v1214
  %v1394 = vadd.f32 %v780, %v1216
  %v1395 = vadd.f32 %v891, %v1327
  %v1396 = vadd.f32 %v893, %v1329
  %v1397 = vadd.f32 %v782, %v1218
  %v1398 = vadd.f32 %v784, %v1220
  %v1399 = vadd.f32 %v895, %v1331
  %v1400 = vadd.f32 %v897, %v1333
  %v1401 = vadd.f32 %v788, %v1224
  %v1402 = vadd.f32 %v790, %v1226
  %v1403 = vadd.f32 %v901, %v1337
  %v1404 = vadd.f32 %v903, %v1339
  %v1405 = vadd.f32 %v792, %v1228
  %v1406 = vadd.f32 %v794, %v1230
  %v1407 = vadd.f32 %v905, %v1341
  %v1408 = vadd.f32 %v907, %v1343
  %v1409 = vld [vmem:[%s2] sm:$0xf]
  %v1411 = vlaneseq
  %v1412 = vshrl.u32 %v1411, 7
  %v1413 = vsub.s32 0, %v1412
  %v1414 = vrot.slane %v1409, %v1413
  %v1415 = vlaneseq
  %v1416 = vshrl.u32 %v1415, 7
  %v1417 = vsub.s32 1, %v1416
  %v1418 = vrot.slane %v1409, %v1417
  %v1419 = vlaneseq
  %v1420 = vshrl.u32 %v1419, 7
  %v1421 = vsub.s32 2, %v1420
  %v1422 = vrot.slane %v1409, %v1421
  %v1423 = vlaneseq
  %v1424 = vshrl.u32 %v1423, 7
  %v1425 = vsub.s32 3, %v1424
  %v1426 = vrot.slane %v1409, %v1425
  %v1431 = vadd.f32 %v1345, %v1414
  %v1432 = vadd.f32 %v1346, %v1418
  %v1433 = vadd.f32 %v1347, %v1422
  %v1434 = vadd.f32 %v1348, %v1426
  %v1435 = vadd.f32 %v1349, %v1414
  %v1436 = vadd.f32 %v1350, %v1418
  %v1437 = vadd.f32 %v1351, %v1422
  %v1438 = vadd.f32 %v1352, %v1426
  %v1439 = vadd.f32 %v1353, %v1414
  %v1440 = vadd.f32 %v1354, %v1418
  %v1441 = vadd.f32 %v1355, %v1422
  %v1442 = vadd.f32 %v1356, %v1426
  %v1443 = vadd.f32 %v1357, %v1414
  %v1444 = vadd.f32 %v1358, %v1418
  %v1445 = vadd.f32 %v1359, %v1422
  %v1446 = vadd.f32 %v1360, %v1426
  %v1447 = vadd.f32 %v1361, %v1414
  %v1448 = vadd.f32 %v1362, %v1418
  %v1449 = vadd.f32 %v1363, %v1422
  %v1450 = vadd.f32 %v1364, %v1426
  %v1451 = vadd.f32 %v1365, %v1414
  %v1452 = vadd.f32 %v1366, %v1418
  %v1453 = vadd.f32 %v1367, %v1422
  %v1454 = vadd.f32 %v1368, %v1426
  %v1455 = vadd.f32 %v1369, %v1414
  %v1456 = vadd.f32 %v1370, %v1418
  %v1457 = vadd.f32 %v1371, %v1422
  %v1458 = vadd.f32 %v1372, %v1426
  %v1459 = vadd.f32 %v1373, %v1414
  %v1460 = vadd.f32 %v1374, %v1418
  %v1461 = vadd.f32 %v1375, %v1422
  %v1462 = vadd.f32 %v1376, %v1426
  %v1463 = vadd.f32 %v1377, %v1414
  %v1464 = vadd.f32 %v1378, %v1418
  %v1465 = vadd.f32 %v1379, %v1422
  %v1466 = vadd.f32 %v1380, %v1426
  %v1467 = vadd.f32 %v1381, %v1414
  %v1468 = vadd.f32 %v1382, %v1418
  %v1469 = vadd.f32 %v1383, %v1422
  %v1470 = vadd.f32 %v1384, %v1426
  %v1471 = vadd.f32 %v1385, %v1414
  %v1472 = vadd.f32 %v1386, %v1418
  %v1473 = vadd.f32 %v1387, %v1422
  %v1474 = vadd.f32 %v1388, %v1426
  %v1475 = vadd.f32 %v1389, %v1414
  %v1476 = vadd.f32 %v1390, %v1418
  %v1477 = vadd.f32 %v1391, %v1422
  %v1478 = vadd.f32 %v1392, %v1426
  %v1479 = vadd.f32 %v1393, %v1414
  %v1480 = vadd.f32 %v1394, %v1418
  %v1481 = vadd.f32 %v1395, %v1422
  %v1482 = vadd.f32 %v1396, %v1426
  %v1483 = vadd.f32 %v1397, %v1414
  %v1484 = vadd.f32 %v1398, %v1418
  %v1485 = vadd.f32 %v1399, %v1422
  %v1486 = vadd.f32 %v1400, %v1426
  %v1487 = vadd.f32 %v1401, %v1414
  %v1488 = vadd.f32 %v1402, %v1418
  %v1489 = vadd.f32 %v1403, %v1422
  %v1490 = vadd.f32 %v1404, %v1426
  %v1491 = vadd.f32 %v1405, %v1414
  %v1492 = vadd.f32 %v1406, %v1418
  %v1493 = vadd.f32 %v1407, %v1422
  %v1494 = vadd.f32 %v1408, %v1426
  %v1495 = vmax.f32 %v1431, 0.0
  %v1496 = vmax.f32 %v1432, 0.0
  %v1497 = vmax.f32 %v1433, 0.0
  %v1498 = vmax.f32 %v1434, 0.0
  %v1499 = vmax.f32 %v1435, 0.0
  %v1500 = vmax.f32 %v1436, 0.0
  %v1501 = vmax.f32 %v1437, 0.0
  %v1502 = vmax.f32 %v1438, 0.0
  %v1503 = vmax.f32 %v1439, 0.0
  %v1504 = vmax.f32 %v1440, 0.0
  %v1505 = vmax.f32 %v1441, 0.0
  %v1506 = vmax.f32 %v1442, 0.0
  %v1507 = vmax.f32 %v1443, 0.0
  %v1508 = vmax.f32 %v1444, 0.0
  %v1509 = vmax.f32 %v1445, 0.0
  %v1510 = vmax.f32 %v1446, 0.0
  %v1511 = vmax.f32 %v1447, 0.0
  %v1512 = vmax.f32 %v1448, 0.0
  %v1513 = vmax.f32 %v1449, 0.0
  %v1514 = vmax.f32 %v1450, 0.0
  %v1515 = vmax.f32 %v1451, 0.0
  %v1516 = vmax.f32 %v1452, 0.0
  %v1517 = vmax.f32 %v1453, 0.0
  %v1518 = vmax.f32 %v1454, 0.0
  %v1519 = vmax.f32 %v1455, 0.0
  %v1520 = vmax.f32 %v1456, 0.0
  %v1521 = vmax.f32 %v1457, 0.0
  %v1522 = vmax.f32 %v1458, 0.0
  %v1523 = vmax.f32 %v1459, 0.0
  %v1524 = vmax.f32 %v1460, 0.0
  %v1525 = vmax.f32 %v1461, 0.0
  %v1526 = vmax.f32 %v1462, 0.0
  %v1527 = vmax.f32 %v1463, 0.0
  %v1528 = vmax.f32 %v1464, 0.0
  %v1529 = vmax.f32 %v1465, 0.0
  %v1530 = vmax.f32 %v1466, 0.0
  %v1531 = vmax.f32 %v1467, 0.0
  %v1532 = vmax.f32 %v1468, 0.0
  %v1533 = vmax.f32 %v1469, 0.0
  %v1534 = vmax.f32 %v1470, 0.0
  %v1535 = vmax.f32 %v1471, 0.0
  %v1536 = vmax.f32 %v1472, 0.0
  %v1537 = vmax.f32 %v1473, 0.0
  %v1538 = vmax.f32 %v1474, 0.0
  %v1539 = vmax.f32 %v1475, 0.0
  %v1540 = vmax.f32 %v1476, 0.0
  %v1541 = vmax.f32 %v1477, 0.0
  %v1542 = vmax.f32 %v1478, 0.0
  %v1543 = vmax.f32 %v1479, 0.0
  %v1544 = vmax.f32 %v1480, 0.0
  %v1545 = vmax.f32 %v1481, 0.0
  %v1546 = vmax.f32 %v1482, 0.0
  %v1547 = vmax.f32 %v1483, 0.0
  %v1548 = vmax.f32 %v1484, 0.0
  %v1549 = vmax.f32 %v1485, 0.0
  %v1550 = vmax.f32 %v1486, 0.0
  %v1551 = vmax.f32 %v1487, 0.0
  %v1552 = vmax.f32 %v1488, 0.0
  %v1553 = vmax.f32 %v1489, 0.0
  %v1554 = vmax.f32 %v1490, 0.0
  %v1555 = vmax.f32 %v1491, 0.0
  %v1556 = vmax.f32 %v1492, 0.0
  %v1557 = vmax.f32 %v1493, 0.0
  %v1558 = vmax.f32 %v1494, 0.0
  %v1559 = vadd.f32 %v1495, %v1499
  %v1560 = vrot.slane %v1559, 4
  %v1561 = vadd.f32 %v1559, %v1560
  %v1562 = vrot.slane %v1561, 2
  %v1563 = vadd.f32 %v1561, %v1562
  %v1564 = vrot.slane %v1563, 1
  %v1565 = vadd.f32 %v1563, %v1564
  %v1566 = vadd.f32 %v1496, %v1500
  %v1567 = vrot.slane %v1566, 4
  %v1568 = vadd.f32 %v1566, %v1567
  %v1569 = vrot.slane %v1568, 2
  %v1570 = vadd.f32 %v1568, %v1569
  %v1571 = vrot.slane %v1570, 1
  %v1572 = vadd.f32 %v1570, %v1571
  %v1573 = vadd.f32 %v1497, %v1501
  %v1574 = vrot.slane %v1573, 4
  %v1575 = vadd.f32 %v1573, %v1574
  %v1576 = vrot.slane %v1575, 2
  %v1577 = vadd.f32 %v1575, %v1576
  %v1578 = vrot.slane %v1577, 1
  %v1579 = vadd.f32 %v1577, %v1578
  %v1580 = vadd.f32 %v1498, %v1502
  %v1581 = vrot.slane %v1580, 4
  %v1582 = vadd.f32 %v1580, %v1581
  %v1583 = vrot.slane %v1582, 2
  %v1584 = vadd.f32 %v1582, %v1583
  %v1585 = vrot.slane %v1584, 1
  %v1586 = vadd.f32 %v1584, %v1585
  %v1587 = vadd.f32 %v1503, %v1507
  %v1588 = vrot.slane %v1587, 4
  %v1589 = vadd.f32 %v1587, %v1588
  %v1590 = vrot.slane %v1589, 2
  %v1591 = vadd.f32 %v1589, %v1590
  %v1592 = vrot.slane %v1591, 1
  %v1593 = vadd.f32 %v1591, %v1592
  %v1594 = vadd.f32 %v1504, %v1508
  %v1595 = vrot.slane %v1594, 4
  %v1596 = vadd.f32 %v1594, %v1595
  %v1597 = vrot.slane %v1596, 2
  %v1598 = vadd.f32 %v1596, %v1597
  %v1599 = vrot.slane %v1598, 1
  %v1600 = vadd.f32 %v1598, %v1599
  %v1601 = vadd.f32 %v1505, %v1509
  %v1602 = vrot.slane %v1601, 4
  %v1603 = vadd.f32 %v1601, %v1602
  %v1604 = vrot.slane %v1603, 2
  %v1605 = vadd.f32 %v1603, %v1604
  %v1606 = vrot.slane %v1605, 1
  %v1607 = vadd.f32 %v1605, %v1606
  %v1608 = vadd.f32 %v1506, %v1510
  %v1609 = vrot.slane %v1608, 4
  %v1610 = vadd.f32 %v1608, %v1609
  %v1611 = vrot.slane %v1610, 2
  %v1612 = vadd.f32 %v1610, %v1611
  %v1613 = vrot.slane %v1612, 1
  %v1614 = vadd.f32 %v1612, %v1613
  %v1615 = vadd.f32 %v1511, %v1515
  %v1616 = vrot.slane %v1615, 4
  %v1617 = vadd.f32 %v1615, %v1616
  %v1618 = vrot.slane %v1617, 2
  %v1619 = vadd.f32 %v1617, %v1618
  %v1620 = vrot.slane %v1619, 1
  %v1621 = vadd.f32 %v1619, %v1620
  %v1622 = vadd.f32 %v1512, %v1516
  %v1623 = vrot.slane %v1622, 4
  %v1624 = vadd.f32 %v1622, %v1623
  %v1625 = vrot.slane %v1624, 2
  %v1626 = vadd.f32 %v1624, %v1625
  %v1627 = vrot.slane %v1626, 1
  %v1628 = vadd.f32 %v1626, %v1627
  %v1629 = vadd.f32 %v1513, %v1517
  %v1630 = vrot.slane %v1629, 4
  %v1631 = vadd.f32 %v1629, %v1630
  %v1632 = vrot.slane %v1631, 2
  %v1633 = vadd.f32 %v1631, %v1632
  %v1634 = vrot.slane %v1633, 1
  %v1635 = vadd.f32 %v1633, %v1634
  %v1636 = vadd.f32 %v1514, %v1518
  %v1637 = vrot.slane %v1636, 4
  %v1638 = vadd.f32 %v1636, %v1637
  %v1639 = vrot.slane %v1638, 2
  %v1640 = vadd.f32 %v1638, %v1639
  %v1641 = vrot.slane %v1640, 1
  %v1642 = vadd.f32 %v1640, %v1641
  %v1643 = vadd.f32 %v1519, %v1523
  %v1644 = vrot.slane %v1643, 4
  %v1645 = vadd.f32 %v1643, %v1644
  %v1646 = vrot.slane %v1645, 2
  %v1647 = vadd.f32 %v1645, %v1646
  %v1648 = vrot.slane %v1647, 1
  %v1649 = vadd.f32 %v1647, %v1648
  %v1650 = vadd.f32 %v1520, %v1524
  %v1651 = vrot.slane %v1650, 4
  %v1652 = vadd.f32 %v1650, %v1651
  %v1653 = vrot.slane %v1652, 2
  %v1654 = vadd.f32 %v1652, %v1653
  %v1655 = vrot.slane %v1654, 1
  %v1656 = vadd.f32 %v1654, %v1655
  %v1657 = vadd.f32 %v1521, %v1525
  %v1658 = vrot.slane %v1657, 4
  %v1659 = vadd.f32 %v1657, %v1658
  %v1660 = vrot.slane %v1659, 2
  %v1661 = vadd.f32 %v1659, %v1660
  %v1662 = vrot.slane %v1661, 1
  %v1663 = vadd.f32 %v1661, %v1662
  %v1664 = vadd.f32 %v1522, %v1526
  %v1665 = vrot.slane %v1664, 4
  %v1666 = vadd.f32 %v1664, %v1665
  %v1667 = vrot.slane %v1666, 2
  %v1668 = vadd.f32 %v1666, %v1667
  %v1669 = vrot.slane %v1668, 1
  %v1670 = vadd.f32 %v1668, %v1669
  %v1671 = vadd.f32 %v1527, %v1531
  %v1672 = vrot.slane %v1671, 4
  %v1673 = vadd.f32 %v1671, %v1672
  %v1674 = vrot.slane %v1673, 2
  %v1675 = vadd.f32 %v1673, %v1674
  %v1676 = vrot.slane %v1675, 1
  %v1677 = vadd.f32 %v1675, %v1676
  %v1678 = vadd.f32 %v1528, %v1532
  %v1679 = vrot.slane %v1678, 4
  %v1680 = vadd.f32 %v1678, %v1679
  %v1681 = vrot.slane %v1680, 2
  %v1682 = vadd.f32 %v1680, %v1681
  %v1683 = vrot.slane %v1682, 1
  %v1684 = vadd.f32 %v1682, %v1683
  %v1685 = vadd.f32 %v1529, %v1533
  %v1686 = vrot.slane %v1685, 4
  %v1687 = vadd.f32 %v1685, %v1686
  %v1688 = vrot.slane %v1687, 2
  %v1689 = vadd.f32 %v1687, %v1688
  %v1690 = vrot.slane %v1689, 1
  %v1691 = vadd.f32 %v1689, %v1690
  %v1692 = vadd.f32 %v1530, %v1534
  %v1693 = vrot.slane %v1692, 4
  %v1694 = vadd.f32 %v1692, %v1693
  %v1695 = vrot.slane %v1694, 2
  %v1696 = vadd.f32 %v1694, %v1695
  %v1697 = vrot.slane %v1696, 1
  %v1698 = vadd.f32 %v1696, %v1697
  %v1699 = vadd.f32 %v1535, %v1539
  %v1700 = vrot.slane %v1699, 4
  %v1701 = vadd.f32 %v1699, %v1700
  %v1702 = vrot.slane %v1701, 2
  %v1703 = vadd.f32 %v1701, %v1702
  %v1704 = vrot.slane %v1703, 1
  %v1705 = vadd.f32 %v1703, %v1704
  %v1706 = vadd.f32 %v1536, %v1540
  %v1707 = vrot.slane %v1706, 4
  %v1708 = vadd.f32 %v1706, %v1707
  %v1709 = vrot.slane %v1708, 2
  %v1710 = vadd.f32 %v1708, %v1709
  %v1711 = vrot.slane %v1710, 1
  %v1712 = vadd.f32 %v1710, %v1711
  %v1713 = vadd.f32 %v1537, %v1541
  %v1714 = vrot.slane %v1713, 4
  %v1715 = vadd.f32 %v1713, %v1714
  %v1716 = vrot.slane %v1715, 2
  %v1717 = vadd.f32 %v1715, %v1716
  %v1718 = vrot.slane %v1717, 1
  %v1719 = vadd.f32 %v1717, %v1718
  %v1720 = vadd.f32 %v1538, %v1542
  %v1721 = vrot.slane %v1720, 4
  %v1722 = vadd.f32 %v1720, %v1721
  %v1723 = vrot.slane %v1722, 2
  %v1724 = vadd.f32 %v1722, %v1723
  %v1725 = vrot.slane %v1724, 1
  %v1726 = vadd.f32 %v1724, %v1725
  %v1727 = vadd.f32 %v1543, %v1547
  %v1728 = vrot.slane %v1727, 4
  %v1729 = vadd.f32 %v1727, %v1728
  %v1730 = vrot.slane %v1729, 2
  %v1731 = vadd.f32 %v1729, %v1730
  %v1732 = vrot.slane %v1731, 1
  %v1733 = vadd.f32 %v1731, %v1732
  %v1734 = vadd.f32 %v1544, %v1548
  %v1735 = vrot.slane %v1734, 4
  %v1736 = vadd.f32 %v1734, %v1735
  %v1737 = vrot.slane %v1736, 2
  %v1738 = vadd.f32 %v1736, %v1737
  %v1739 = vrot.slane %v1738, 1
  %v1740 = vadd.f32 %v1738, %v1739
  %v1741 = vadd.f32 %v1545, %v1549
  %v1742 = vrot.slane %v1741, 4
  %v1743 = vadd.f32 %v1741, %v1742
  %v1744 = vrot.slane %v1743, 2
  %v1745 = vadd.f32 %v1743, %v1744
  %v1746 = vrot.slane %v1745, 1
  %v1747 = vadd.f32 %v1745, %v1746
  %v1748 = vadd.f32 %v1546, %v1550
  %v1749 = vrot.slane %v1748, 4
  %v1750 = vadd.f32 %v1748, %v1749
  %v1751 = vrot.slane %v1750, 2
  %v1752 = vadd.f32 %v1750, %v1751
  %v1753 = vrot.slane %v1752, 1
  %v1754 = vadd.f32 %v1752, %v1753
  %v1755 = vadd.f32 %v1551, %v1555
  %v1756 = vrot.slane %v1755, 4
  %v1757 = vadd.f32 %v1755, %v1756
  %v1758 = vrot.slane %v1757, 2
  %v1759 = vadd.f32 %v1757, %v1758
  %v1760 = vrot.slane %v1759, 1
  %v1761 = vadd.f32 %v1759, %v1760
  %v1762 = vadd.f32 %v1552, %v1556
  %v1763 = vrot.slane %v1762, 4
  %v1764 = vadd.f32 %v1762, %v1763
  %v1765 = vrot.slane %v1764, 2
  %v1766 = vadd.f32 %v1764, %v1765
  %v1767 = vrot.slane %v1766, 1
  %v1768 = vadd.f32 %v1766, %v1767
  %v1769 = vadd.f32 %v1553, %v1557
  %v1770 = vrot.slane %v1769, 4
  %v1771 = vadd.f32 %v1769, %v1770
  %v1772 = vrot.slane %v1771, 2
  %v1773 = vadd.f32 %v1771, %v1772
  %v1774 = vrot.slane %v1773, 1
  %v1775 = vadd.f32 %v1773, %v1774
  %v1776 = vadd.f32 %v1554, %v1558
  %v1777 = vrot.slane %v1776, 4
  %v1778 = vadd.f32 %v1776, %v1777
  %v1779 = vrot.slane %v1778, 2
  %v1780 = vadd.f32 %v1778, %v1779
  %v1781 = vrot.slane %v1780, 1
  %v1782 = vadd.f32 %v1780, %v1781
  %v1783 = vld [vmem:[%s3] sm:$0xff]
  %v1784 = vld [vmem:[%s3 + $0x8] sm:$0xff]
  %v1785 = vld [vmem:[%s3 + $0x10] sm:$0xff]
  %v1786 = vld [vmem:[%s3 + $0x18] sm:$0xff]
  %v1787 = vld [vmem:[%s3 + $0x20] sm:$0xff]
  %v1788 = vld [vmem:[%s3 + $0x28] sm:$0xff]
  %v1789 = vld [vmem:[%s3 + $0x30] sm:$0xff]
  %v1790 = vld [vmem:[%s3 + $0x38] sm:$0xff]
  %v1791 = vld [vmem:[%s3 + $0x40] sm:$0xff]
  %v1792 = vld [vmem:[%s3 + $0x48] sm:$0xff]
  %v1793 = vld [vmem:[%s3 + $0x50] sm:$0xff]
  %v1794 = vld [vmem:[%s3 + $0x58] sm:$0xff]
  %v1795 = vld [vmem:[%s3 + $0x60] sm:$0xff]
  %v1796 = vld [vmem:[%s3 + $0x68] sm:$0xff]
  %v1797 = vld [vmem:[%s3 + $0x70] sm:$0xff]
  %v1798 = vld [vmem:[%s3 + $0x78] sm:$0xff]
  %v1799 = vld [vmem:[%s3 + $0x80] sm:$0xff]
  %v1800 = vld [vmem:[%s3 + $0x88] sm:$0xff]
  %v1801 = vld [vmem:[%s3 + $0x90] sm:$0xff]
  %v1802 = vld [vmem:[%s3 + $0x98] sm:$0xff]
  %v1803 = vld [vmem:[%s3 + $0xa0] sm:$0xff]
  %v1804 = vld [vmem:[%s3 + $0xa8] sm:$0xff]
  %v1805 = vld [vmem:[%s3 + $0xb0] sm:$0xff]
  %v1806 = vld [vmem:[%s3 + $0xb8] sm:$0xff]
  %v1807 = vld [vmem:[%s3 + $0xc0] sm:$0xff]
  %v1808 = vld [vmem:[%s3 + $0xc8] sm:$0xff]
  %v1809 = vld [vmem:[%s3 + $0xd0] sm:$0xff]
  %v1810 = vld [vmem:[%s3 + $0xd8] sm:$0xff]
  %v1811 = vld [vmem:[%s3 + $0xe0] sm:$0xff]
  %v1812 = vld [vmem:[%s3 + $0xe8] sm:$0xff]
  %v1813 = vld [vmem:[%s3 + $0xf0] sm:$0xff]
  %v1814 = vld [vmem:[%s3 + $0xf8] sm:$0xff]
  %v1815 = vld [vmem:[%s3 + $0x100] sm:$0xff]
  %v1816 = vld [vmem:[%s3 + $0x108] sm:$0xff]
  %v1817 = vld [vmem:[%s3 + $0x110] sm:$0xff]
  %v1818 = vld [vmem:[%s3 + $0x118] sm:$0xff]
  %v1819 = vld [vmem:[%s3 + $0x120] sm:$0xff]
  %v1820 = vld [vmem:[%s3 + $0x128] sm:$0xff]
  %v1821 = vld [vmem:[%s3 + $0x130] sm:$0xff]
  %v1822 = vld [vmem:[%s3 + $0x138] sm:$0xff]
  %v1823 = vld [vmem:[%s3 + $0x140] sm:$0xff]
  %v1824 = vld [vmem:[%s3 + $0x148] sm:$0xff]
  %v1825 = vld [vmem:[%s3 + $0x150] sm:$0xff]
  %v1826 = vld [vmem:[%s3 + $0x158] sm:$0xff]
  %v1827 = vld [vmem:[%s3 + $0x160] sm:$0xff]
  %v1828 = vld [vmem:[%s3 + $0x168] sm:$0xff]
  %v1829 = vld [vmem:[%s3 + $0x170] sm:$0xff]
  %v1830 = vld [vmem:[%s3 + $0x178] sm:$0xff]
  %v1831 = vld [vmem:[%s3 + $0x180] sm:$0xff]
  %v1832 = vld [vmem:[%s3 + $0x188] sm:$0xff]
  %v1833 = vld [vmem:[%s3 + $0x190] sm:$0xff]
  %v1834 = vld [vmem:[%s3 + $0x198] sm:$0xff]
  %v1835 = vld [vmem:[%s3 + $0x1a0] sm:$0xff]
  %v1836 = vld [vmem:[%s3 + $0x1a8] sm:$0xff]
  %v1837 = vld [vmem:[%s3 + $0x1b0] sm:$0xff]
  %v1838 = vld [vmem:[%s3 + $0x1b8] sm:$0xff]
  %v1839 = vld [vmem:[%s3 + $0x1c0] sm:$0xff]
  %v1840 = vld [vmem:[%s3 + $0x1c8] sm:$0xff]
  %v1841 = vld [vmem:[%s3 + $0x1d0] sm:$0xff]
  %v1842 = vld [vmem:[%s3 + $0x1d8] sm:$0xff]
  %v1843 = vld [vmem:[%s3 + $0x1e0] sm:$0xff]
  %v1844 = vld [vmem:[%s3 + $0x1e8] sm:$0xff]
  %v1845 = vld [vmem:[%s3 + $0x1f0] sm:$0xff]
  %v1846 = vld [vmem:[%s3 + $0x1f8] sm:$0xff]
  %v1847 = vld [vmem:[%s4] sm:$0x1]
  %v1849 = vlaneseq
  %v1850 = vshrl.u32 %v1849, 7
  %v1851 = vsub.s32 0, %v1850
  %v1852 = vrot.slane %v1847, %v1851
  %vm1886 = vcmask 1041409
  %v1887 = vsel %vm1886, %v1593, %v1565
  %vm1888 = vcmask 1042434
  %v1889 = vsel %vm1888, %v1621, %v1887
  %vm1890 = vcmask 1043459
  %v1891 = vsel %vm1890, %v1649, %v1889
  %vm1892 = vcmask 1044484
  %v1893 = vsel %vm1892, %v1677, %v1891
  %vm1894 = vcmask 1045509
  %v1895 = vsel %vm1894, %v1705, %v1893
  %vm1896 = vcmask 1046534
  %v1897 = vsel %vm1896, %v1733, %v1895
  %vm1898 = vcmask 1047559
  %v1899 = vsel %vm1898, %v1761, %v1897
  %v1900 = vsel %vm1886, %v1600, %v1572
  %v1901 = vsel %vm1888, %v1628, %v1900
  %v1902 = vsel %vm1890, %v1656, %v1901
  %v1903 = vsel %vm1892, %v1684, %v1902
  %v1904 = vsel %vm1894, %v1712, %v1903
  %v1905 = vsel %vm1896, %v1740, %v1904
  %v1906 = vsel %vm1898, %v1768, %v1905
  %v1907 = vsel %vm1886, %v1607, %v1579
  %v1908 = vsel %vm1888, %v1635, %v1907
  %v1909 = vsel %vm1890, %v1663, %v1908
  %v1910 = vsel %vm1892, %v1691, %v1909
  %v1911 = vsel %vm1894, %v1719, %v1910
  %v1912 = vsel %vm1896, %v1747, %v1911
  %v1913 = vsel %vm1898, %v1775, %v1912
  %v1914 = vsel %vm1886, %v1614, %v1586
  %v1915 = vsel %vm1888, %v1642, %v1914
  %v1916 = vsel %vm1890, %v1670, %v1915
  %v1917 = vsel %vm1892, %v1698, %v1916
  %v1918 = vsel %vm1894, %v1726, %v1917
  %v1919 = vsel %vm1896, %v1754, %v1918
  %v1920 = vsel %vm1898, %v1782, %v1919
  %1925 = vmatprep.subr.mxu0 0.0
  %1926 = vmatpush1.msra.mxu0 %v1783
  %1927 = vmatprep.subr.mxu0 0.0
  %1928 = vmatpush1.msra.mxu0 %v1784
  %1929 = vmatprep.subr.mxu0 0.0
  %1930 = vmatpush1.msra.mxu0 %v1785
  %1931 = vmatprep.subr.mxu0 0.0
  %1932 = vmatpush1.msra.mxu0 %v1786
  %1933 = vmatprep.subr.mxu0 0.0
  %1934 = vmatpush1.msra.mxu0 %v1787
  %1935 = vmatprep.subr.mxu0 0.0
  %1936 = vmatpush1.msra.mxu0 %v1788
  %1937 = vmatprep.subr.mxu0 0.0
  %1938 = vmatpush1.msra.mxu0 %v1789
  %1939 = vmatprep.subr.mxu0 0.0
  %1940 = vmatpush1.msra.mxu0 %v1790
  %1941 = vmatprep.subr.mxu0 0.0
  %1942 = vmatpush1.msra.mxu0 %v1791
  %1943 = vmatprep.subr.mxu0 0.0
  %1944 = vmatpush1.msra.mxu0 %v1792
  %1945 = vmatprep.subr.mxu0 0.0
  %1946 = vmatpush1.msra.mxu0 %v1793
  %1947 = vmatprep.subr.mxu0 0.0
  %1948 = vmatpush1.msra.mxu0 %v1794
  %1949 = vmatprep.subr.mxu0 0.0
  %1950 = vmatpush1.msra.mxu0 %v1795
  %1951 = vmatprep.subr.mxu0 0.0
  %1952 = vmatpush1.msra.mxu0 %v1796
  %1953 = vmatprep.subr.mxu0 0.0
  %1954 = vmatpush1.msra.mxu0 %v1797
  %1955 = vmatprep.subr.mxu0 0.0
  %1956 = vmatpush1.msra.mxu0 %v1798
  %1957 = vmatprep.subr.mxu0 0.0
  %1958 = vmatpush1.msra.mxu0 %v1799
  %1959 = vmatprep.subr.mxu0 0.0
  %1960 = vmatpush1.msra.mxu0 %v1800
  %1961 = vmatprep.subr.mxu0 0.0
  %1962 = vmatpush1.msra.mxu0 %v1801
  %1963 = vmatprep.subr.mxu0 0.0
  %1964 = vmatpush1.msra.mxu0 %v1802
  %1965 = vmatprep.subr.mxu0 0.0
  %1966 = vmatpush1.msra.mxu0 %v1803
  %1967 = vmatprep.subr.mxu0 0.0
  %1968 = vmatpush1.msra.mxu0 %v1804
  %1969 = vmatprep.subr.mxu0 0.0
  %1970 = vmatpush1.msra.mxu0 %v1805
  %1971 = vmatprep.subr.mxu0 0.0
  %1972 = vmatpush1.msra.mxu0 %v1806
  %1973 = vmatprep.subr.mxu0 0.0
  %1974 = vmatpush1.msra.mxu0 %v1807
  %1975 = vmatprep.subr.mxu0 0.0
  %1976 = vmatpush1.msra.mxu0 %v1808
  %1977 = vmatprep.subr.mxu0 0.0
  %1978 = vmatpush1.msra.mxu0 %v1809
  %1979 = vmatprep.subr.mxu0 0.0
  %1980 = vmatpush1.msra.mxu0 %v1810
  %1981 = vmatprep.subr.mxu0 0.0
  %1982 = vmatpush1.msra.mxu0 %v1811
  %1983 = vmatprep.subr.mxu0 0.0
  %1984 = vmatpush1.msra.mxu0 %v1812
  %1985 = vmatprep.subr.mxu0 0.0
  %1986 = vmatpush1.msra.mxu0 %v1813
  %1987 = vmatprep.subr.mxu0 0.0
  %1988 = vmatpush1.msra.mxu0 %v1814
  %1989 = vmatprep.mubr.f32.mxu0 %v1906
  %1990 = vmatmul.mubr.f32.gmra.mrb[0].mxu0 %v1899
  %v1991 = vpop.f32.mrb[0].mxu0
  %v1992 = vadd.f32 %v1852, %v1991
  %v1993 = vpop.f32.mrb[0].mxu0
  %1994 = vdwg.mxu0
  %1995 = vmatprep.subr.mxu0 0.0
  %1996 = vmatpush1.msra.mxu0 %v1815
  %1997 = vmatprep.subr.mxu0 0.0
  %1998 = vmatpush1.msra.mxu0 %v1816
  %1999 = vmatprep.subr.mxu0 0.0
  %2000 = vmatpush1.msra.mxu0 %v1817
  %2001 = vmatprep.subr.mxu0 0.0
  %2002 = vmatpush1.msra.mxu0 %v1818
  %2003 = vmatprep.subr.mxu0 0.0
  %2004 = vmatpush1.msra.mxu0 %v1819
  %2005 = vmatprep.subr.mxu0 0.0
  %2006 = vmatpush1.msra.mxu0 %v1820
  %2007 = vmatprep.subr.mxu0 0.0
  %2008 = vmatpush1.msra.mxu0 %v1821
  %2009 = vmatprep.subr.mxu0 0.0
  %2010 = vmatpush1.msra.mxu0 %v1822
  %2011 = vmatprep.subr.mxu0 0.0
  %2012 = vmatpush1.msra.mxu0 %v1823
  %2013 = vmatprep.subr.mxu0 0.0
  %2014 = vmatpush1.msra.mxu0 %v1824
  %2015 = vmatprep.subr.mxu0 0.0
  %2016 = vmatpush1.msra.mxu0 %v1825
  %2017 = vmatprep.subr.mxu0 0.0
  %2018 = vmatpush1.msra.mxu0 %v1826
  %2019 = vmatprep.subr.mxu0 0.0
  %2020 = vmatpush1.msra.mxu0 %v1827
  %2021 = vmatprep.subr.mxu0 0.0
  %2022 = vmatpush1.msra.mxu0 %v1828
  %2023 = vmatprep.subr.mxu0 0.0
  %2024 = vmatpush1.msra.mxu0 %v1829
  %2025 = vmatprep.subr.mxu0 0.0
  %2026 = vmatpush1.msra.mxu0 %v1830
  %2027 = vmatprep.subr.mxu0 0.0
  %2028 = vmatpush1.msra.mxu0 %v1831
  %2029 = vmatprep.subr.mxu0 0.0
  %2030 = vmatpush1.msra.mxu0 %v1832
  %2031 = vmatprep.subr.mxu0 0.0
  %2032 = vmatpush1.msra.mxu0 %v1833
  %2033 = vmatprep.subr.mxu0 0.0
  %2034 = vmatpush1.msra.mxu0 %v1834
  %2035 = vmatprep.subr.mxu0 0.0
  %2036 = vmatpush1.msra.mxu0 %v1835
  %2037 = vmatprep.subr.mxu0 0.0
  %2038 = vmatpush1.msra.mxu0 %v1836
  %2039 = vmatprep.subr.mxu0 0.0
  %2040 = vmatpush1.msra.mxu0 %v1837
  %2041 = vmatprep.subr.mxu0 0.0
  %2042 = vmatpush1.msra.mxu0 %v1838
  %2043 = vmatprep.subr.mxu0 0.0
  %2044 = vmatpush1.msra.mxu0 %v1839
  %2045 = vmatprep.subr.mxu0 0.0
  %2046 = vmatpush1.msra.mxu0 %v1840
  %2047 = vmatprep.subr.mxu0 0.0
  %2048 = vmatpush1.msra.mxu0 %v1841
  %2049 = vmatprep.subr.mxu0 0.0
  %2050 = vmatpush1.msra.mxu0 %v1842
  %2051 = vmatprep.subr.mxu0 0.0
  %2052 = vmatpush1.msra.mxu0 %v1843
  %2053 = vmatprep.subr.mxu0 0.0
  %2054 = vmatpush1.msra.mxu0 %v1844
  %2055 = vmatprep.subr.mxu0 0.0
  %2056 = vmatpush1.msra.mxu0 %v1845
  %2057 = vmatprep.subr.mxu0 0.0
  %2058 = vmatpush1.msra.mxu0 %v1846
  %2059 = vmatprep.mubr.f32.mxu0 %v1920
  %2060 = vmatmul.mubr.f32.gmra.mrb[0].mxu0 %v1913
  %v2061 = vpop.f32.mrb[0].mxu0
  %v2062 = vadd.f32 %v1992, %v2061
  %v2063 = vpop.f32.mrb[0].mxu0
  %2064 = vdwg.mxu0
  %2065 = vst [vmem:[%s5] sm:$0xff] %v2062
  // Predicated region
  $region22: #{mixmatch_forward.1} parent=0 // pred_check
    _
  $region23: #{mixmatch_forward.1} parent=0 // pred_check_branch
    %2067 = sbr.rel (0) target = $region25
  $region24: #{mixmatch_forward.1} parent=0 // pred_region
    _
  $region25: #{mixmatch_forward.1} parent=0 // pred_fallthru
    _
  // Predicated region
  $region26: #{mixmatch_forward.1} parent=0 // pred_check
    _
  $region27: #{mixmatch_forward.1} parent=0 // pred_check_branch
    %2069 = sbr.rel (0) target = $region29
  $region28: #{mixmatch_forward.1} parent=0 // pred_region
    _
  $region29: #{mixmatch_forward.1} parent=0 // pred_fallthru
    _

</llo_original>
